<compile_context>
chip_gen: v6e
topology: v6e:2x2x1
jax: 0.10.0
libtpu: 0.0.40
codegen_flags: <defaults>
</compile_context>

<pallas_src>
import functools

import jax
import jax.numpy as jnp
from jax.experimental import pallas as pl
from jax.experimental.pallas import tpu as pltpu

IN_DIM = 784    # linear1 in_features
HID_DIM = 512   # linear1 out_features / linear2 in_features
OUT_DIM = 10    # linear2 out_features (logical)
OUT_PAD = 128   # lane-dense padded output width


def _round_up(x, m):
    return ((x + m - 1) // m) * m


def _vmem_capacity_bytes():
    """Physical VMEM per core; conservative fallback (v7x: 64 MiB/TC)."""
    try:
        return int(pltpu.get_tpu_info().vmem_capacity_bytes)
    except Exception:
        return 64 * 1024 * 1024


def _mlp_three_kernel(x_ref, w1_ref, w2_ref, o_ref):
    # x_ref : (TB, 784) f32|bf16   w1_ref : (784, 512) bf16
    # w2_ref: (512, 128) bf16      o_ref  : (TB, 128) f32
    x = x_ref[...].astype(jnp.bfloat16)                                   # no-op if already bf16
    h = jnp.dot(x, w1_ref[...], preferred_element_type=jnp.float32)       # MXU matmul 1
    h = jnp.maximum(h, 0.0)                                               # ReLU in f32 (VPU)
    y = jnp.dot(h.astype(jnp.bfloat16), w2_ref[...],
                preferred_element_type=jnp.float32)                       # MXU matmul 2
    o_ref[...] = y.astype(o_ref.dtype)


def prepare_weights(w1, w2):
    """One-time weight prep (do this OUTSIDE the per-call hot path).

    w1: (512, 784) f32, w2: (10, 512) f32  (PyTorch (out, in) layout)
    Returns (w1t, w2t_pad): (784, 512) bf16 and (512, 128) bf16 (zero-padded).
    """
    w1t = jnp.asarray(w1.T, dtype=jnp.bfloat16)                       # (784, 512)
    w2t = jnp.zeros((HID_DIM, OUT_PAD), dtype=jnp.bfloat16)
    w2t = w2t.at[:, :OUT_DIM].set(w2.T.astype(jnp.bfloat16))          # (512, 128)
    return w1t, w2t


@functools.partial(jax.jit, static_argnames=("block_b",))
def mlp_three(x, w1t, w2t, *, block_b=None):
    """x: (B, 784) f32 or bf16; w1t: (784, 512) bf16; w2t: (512, 128) bf16 -> (B, 10) f32."""
    B = x.shape[0]
    x_bytes = jnp.dtype(x.dtype).itemsize
    vmem_cap = _vmem_capacity_bytes()

    # Default batch tile from VMEM capacity: 4096 on 128 MiB parts (v5e/v6e),
    # 2048 on 64 MiB/TC parts (v7x).
    if block_b is None:
        block_b = 4096 if vmem_cap >= 100 * 1024 * 1024 else 2048
    block_b = _round_up(int(block_b), 8)

    # Tile: sublane-aligned for tiny batches, 128-aligned (full MXU M) otherwise.
    align = 128 if B >= 128 else 8
    TB = min(block_b, _round_up(B, align))
    nb = pl.cdiv(B, TB)   # ragged last block: OOB writeback is masked by Pallas.
    # NOTE: ragged edge rows compute on garbage input rows; safe because there is
    # no cross-row reduction in this kernel and those output rows are sliced off.

    # Explicit VMEM budget: double-buffered x/out tiles + single-buffered
    # resident weights + intermediates, with 2x headroom, capped at physical VMEM.
    footprint = (2 * TB * IN_DIM * x_bytes     # x tiles (double-buffered)
                 + IN_DIM * HID_DIM * 2        # w1t (bf16, single-buffered)
                 + HID_DIM * OUT_PAD * 2       # w2t (bf16, single-buffered)
                 + 2 * TB * OUT_PAD * 4        # out tiles (f32, double-buffered)
                 + TB * HID_DIM * (4 + 2)      # h (f32) + h cast to bf16
                 + TB * OUT_PAD * 4)           # y (f32)
    vmem_limit = min(max(2 * footprint, 32 * 1024 * 1024), vmem_cap)

    cost = pl.CostEstimate(
        flops=2 * B * (IN_DIM * HID_DIM + HID_DIM * OUT_PAD),
        transcendentals=0,
        bytes_accessed=(B * IN_DIM * x_bytes + IN_DIM * HID_DIM * 2
                        + HID_DIM * OUT_PAD * 2 + B * OUT_PAD * 4),
    )

    out = pl.pallas_call(
        _mlp_three_kernel,
        out_shape=jax.ShapeDtypeStruct((B, OUT_PAD), jnp.float32),
        grid_spec=pltpu.PrefetchScalarGridSpec(
            num_scalar_prefetch=0,
            grid=(nb,),
            in_specs=[
                # x: pipelined per batch tile (double-buffered by default).
                pl.BlockSpec((TB, IN_DIM), lambda i: (i, 0)),
                # Weights: constant block index -> VMEM-resident; single buffer.
                pl.BlockSpec((IN_DIM, HID_DIM), lambda i: (0, 0),
                             pipeline_mode=pl.Buffered(1)),
                pl.BlockSpec((HID_DIM, OUT_PAD), lambda i: (0, 0),
                             pipeline_mode=pl.Buffered(1)),
            ],
            out_specs=pl.BlockSpec((TB, OUT_PAD), lambda i: (i, 0)),
        ),
        compiler_params=pltpu.CompilerParams(
            # Batch tiles are independent.
            # TODO(synk): verify in xprof that v7x actually splits the grid over
            # both TensorCores; if not, switch to CORE_PARALLEL / pl.core_map.
            dimension_semantics=("parallel",),
            vmem_limit_bytes=int(vmem_limit),
        ),
        cost_estimate=cost,
    )(x, w1t, w2t)

    # Strip the lane-padded output columns (fused by XLA under jit; downstream
    # consumers can fuse this slice themselves and take the (B, 128) slab).
    return out[:, :OUT_DIM]


def _reference_f32(x, w1, w2):
    h = jnp.maximum(x.astype(jnp.float32) @ w1.T, 0.0)
    return h @ w2.T


def _reference_bf16(x, w1, w2):
    # Emulates the kernel's numerics: bf16 operands, f32 accumulation.
    xb = x.astype(jnp.bfloat16)
    h = jnp.maximum(
        jnp.dot(xb, w1.T.astype(jnp.bfloat16), preferred_element_type=jnp.float32), 0.0)
    return jnp.dot(h.astype(jnp.bfloat16), w2.T.astype(jnp.bfloat16),
                   preferred_element_type=jnp.float32)


if __name__ == "__main__":
    key = jax.random.PRNGKey(0)
    kx, k1, k2, kx2 = jax.random.split(key, 4)

    # Parameters in PyTorch Linear layout (out, in), init scaled ~1/sqrt(fan_in).
    w1 = jax.random.uniform(k1, (HID_DIM, IN_DIM), jnp.float32,
                            minval=-1.0, maxval=1.0) / jnp.sqrt(IN_DIM)
    w2 = jax.random.uniform(k2, (OUT_DIM, HID_DIM), jnp.float32,
                            minval=-1.0, maxval=1.0) / jnp.sqrt(HID_DIM)
    w1t, w2t = prepare_weights(w1, w2)   # one-time prep, reused across calls

    # Small batch, f32 input, single grid step.
    B = 8
    x = jax.random.normal(kx, (B, IN_DIM), dtype=jnp.float32)
    out = jax.block_until_ready(mlp_three(x, w1t, w2t))
    assert out.shape == (B, OUT_DIM) and out.dtype == jnp.float32
    assert jnp.allclose(out, _reference_bf16(x, w1, w2), atol=2e-2, rtol=2e-2)
    assert jnp.allclose(out, _reference_f32(x, w1, w2), atol=1e-1, rtol=1e-1)

    # Ragged batch with a small tile: multi-step pipelining + masked edge-block
    # writeback (no wrapper-side padding pass).
    B2 = 50
    x2 = jax.random.normal(kx2, (B2, IN_DIM), dtype=jnp.float32)
    out2 = jax.block_until_ready(mlp_three(x2, w1t, w2t, block_b=16))
    assert out2.shape == (B2, OUT_DIM)
    assert jnp.allclose(out2, _reference_bf16(x2, w1, w2), atol=2e-2, rtol=2e-2)

    # bf16 input fast path (halves the dominant x HBM stream on v6e/v7x).
    out3 = jax.block_until_ready(mlp_three(x2.astype(jnp.bfloat16), w1t, w2t, block_b=16))
    assert out3.shape == (B2, OUT_DIM)
    assert jnp.allclose(out3, _reference_bf16(x2, w1, w2), atol=3e-2, rtol=3e-2)

    print("KERNEL_OK")
</pallas_src>

<mosaic_0001>
module attributes {stable_mosaic.version = 11 : i64} {
  func.func @_mlp_three_kernel(%arg0: i32, %arg1: memref<8x784xf32, #tpu.memory_space<vmem>>, %arg2: memref<784x512xbf16, #tpu.memory_space<vmem>>, %arg3: memref<512x128xbf16, #tpu.memory_space<vmem>>, %arg4: memref<8x128xf32, #tpu.memory_space<vmem>>) attributes {dimension_semantics = [#tpu.dimension_semantics<parallel>], iteration_bounds = array<i64: 1>, scalar_prefetch = 0 : i64, scratch_operands = 0 : i64, tpu.core_type = #tpu.core_type<tc>, window_params = [{transform_indices = @transform_0, window_bounds = array<i64: 8, 784>}, {pipeline_mode = #tpu.pipeline_mode<synchronous>, transform_indices = @transform_1, window_bounds = array<i64: 784, 512>}, {pipeline_mode = #tpu.pipeline_mode<synchronous>, transform_indices = @transform_2, window_bounds = array<i64: 512, 128>}, {transform_indices = @transform_3, window_bounds = array<i64: 8, 128>}]} {
    %c0 = arith.constant 0 : index
    %c0_0 = arith.constant 0 : index
    %0 = vector.load %arg1[%c0, %c0_0] : memref<8x784xf32, #tpu.memory_space<vmem>>, vector<8x784xf32>
    %1 = arith.truncf %0 : vector<8x784xf32> to vector<8x784xbf16>
    %c0_1 = arith.constant 0 : index
    %c0_2 = arith.constant 0 : index
    %2 = vector.load %arg2[%c0_1, %c0_2] : memref<784x512xbf16, #tpu.memory_space<vmem>>, vector<784x512xbf16>
    %cst = arith.constant dense<0.000000e+00> : vector<8x512xf32>
    %3 = tpu.matmul %1, %2, %cst {dimension_numbers = #tpu.dot_dimension_numbers<[1], [0], [0], [1], [0, 0, 1, 1], [], []>} : vector<8x784xbf16>, vector<784x512xbf16>, vector<8x512xf32> -> vector<8x512xf32>
    %cst_3 = arith.constant 0.000000e+00 : f32
    %4 = vector.broadcast %cst_3 : f32 to vector<8x512xf32>
    %5 = arith.maximumf %3, %4 : vector<8x512xf32>
    %6 = arith.truncf %5 : vector<8x512xf32> to vector<8x512xbf16>
    %c0_4 = arith.constant 0 : index
    %c0_5 = arith.constant 0 : index
    %7 = vector.load %arg3[%c0_4, %c0_5] : memref<512x128xbf16, #tpu.memory_space<vmem>>, vector<512x128xbf16>
    %cst_6 = arith.constant dense<0.000000e+00> : vector<8x128xf32>
    %8 = tpu.matmul %6, %7, %cst_6 {dimension_numbers = #tpu.dot_dimension_numbers<[1], [0], [0], [1], [0, 0, 1, 1], [], []>} : vector<8x512xbf16>, vector<512x128xbf16>, vector<8x128xf32> -> vector<8x128xf32>
    %c0_7 = arith.constant 0 : index
    %c0_8 = arith.constant 0 : index
    %9 = vector.load %arg4[%c0_7, %c0_8] : memref<8x128xf32, #tpu.memory_space<vmem>>, vector<8x128xf32>
    tpu.vector_store %arg4[%c0_7, %c0_8], %8 {strides = array<i32>} : memref<8x128xf32, #tpu.memory_space<vmem>>, vector<8x128xf32>,
    return
  }
  func.func @transform_0(%arg0: i32) -> (i32, i32) {
    %c0_i32 = arith.constant 0 : i32
    %c0_i32_0 = arith.constant 0 : i32
    return %arg0, %c0_i32 : i32, i32
  }
  func.func @transform_1(%arg0: i32) -> (i32, i32) {
    %c0_i32 = arith.constant 0 : i32
    %c0_i32_0 = arith.constant 0 : i32
    %c0_i32_1 = arith.constant 0 : i32
    return %c0_i32, %c0_i32_0 : i32, i32
  }
  func.func @transform_2(%arg0: i32) -> (i32, i32) {
    %c0_i32 = arith.constant 0 : i32
    %c0_i32_0 = arith.constant 0 : i32
    %c0_i32_1 = arith.constant 0 : i32
    return %c0_i32, %c0_i32_0 : i32, i32
  }
  func.func @transform_3(%arg0: i32) -> (i32, i32) {
    %c0_i32 = arith.constant 0 : i32
    %c0_i32_0 = arith.constant 0 : i32
    return %arg0, %c0_i32 : i32, i32
  }
}

</mosaic_0001>

<llo_original>
// kernel: mlp_three.1
$region0: #{mlp_three.1}
  #allocation0 [shape = 'u32[]', space=smem, size = 0x4, offset = 0x4, fixed_abs, tag = 'smem constant byte address 0x4 - core index']
  #allocation1 [shape = 'u32[144,128]{1,0:T(1,128)}', space=vmem, size = 0x12000, scoped, tag = 'internal scratch']
  %s0 = inlined_call_operand.hbm [shape: f32[8,784], index: 0, kind: input, shape index: {}]
  %s1 = inlined_call_operand.hbm [shape: bf16[784,512], index: 1, kind: input, shape index: {}]
  %s2 = inlined_call_operand.hbm [shape: bf16[512,128], index: 2, kind: input, shape index: {}]
  %s3 = inlined_call_operand.hbm [shape: f32[8,128], index: 3, kind: output, shape index: {}]
  %s4 = sld [smem:[#allocation0]]
  $region34: #{mlp_three.1} parent=0
    _
  %s6 = ssub.s32 1, %s4
  %s7 = scalar_select 0, %s6, %s4
  $region1: #{mlp_three.1} parent=0
    #allocation2 [shape = 'u8[28672]{0}', space=vmem, size = 0x7000, scoped, tag = 'input window, operand 0, single buffered']
    #allocation3 [shape = 's32[1]{0}', space=sflag, size = 0x4, scoped, tag = 'scoped memory for mlp_three.1']
    #allocation4 [shape = 's32[1]{0}', space=sflag, size = 0x4, scoped, tag = 'scoped memory for mlp_three.1']
    #allocation5 [shape = 'u8[802816]{0}', space=vmem, size = 0xc4000, scoped, tag = 'input window, operand 1, single buffered']
    #allocation6 [shape = 's32[1]{0}', space=sflag, size = 0x4, scoped, tag = 'scoped memory for mlp_three.1']
    #allocation7 [shape = 'u8[131072]{0}', space=vmem, size = 0x20000, scoped, tag = 'input window, operand 2, single buffered']
    #allocation8 [shape = 'u8[4096]{0}', space=vmem, size = 0x1000, scoped, tag = 'output window, operand 0, single buffered']
    %8 = vsyncpa [#allocation3], 0
    %9 = vsyncpa [#allocation6], 0
    %10 = vsyncpa [#allocation4], 0
    // Predicated region
    $region2: #{mlp_three.1} parent=1 // pred_check
      _
    $region3: #{mlp_three.1} parent=1 // pred_check_branch
      %12 = sbr.rel (0) target = $region5
    $region4: #{mlp_three.1} parent=1 // pred_region
      %s14 = ssub.s32 896, 896
      %15 = vsyncadd [#allocation3], %s14
      %s17 = sshll.u32 [#allocation2], 4
      %s18 = int_to_ptr.vmem [resolvable:$true] %s17
      %20 = dma.hbm_to_vmem [thread:$0]  %s0, 896, %s18, [#allocation3]
    $region5: #{mlp_three.1} parent=1 // pred_fallthru
      _
    // Predicated region
    $region6: #{mlp_three.1} parent=1 // pred_check
      _
    $region7: #{mlp_three.1} parent=1 // pred_check_branch
      %22 = sbr.rel (0) target = $region9
    $region8: #{mlp_three.1} parent=1 // pred_region
      %s24 = ssub.s32 25088, 25088
      %25 = vsyncadd [#allocation6], %s24
      %s26 = sshll.u32 [#allocation5], 4
      %s27 = int_to_ptr.vmem [resolvable:$true] %s26
      %32 = dma.hbm_to_vmem [thread:$0]  %s1, 25088, %s27, [#allocation6], 256, 256, 16
    $region9: #{mlp_three.1} parent=1 // pred_fallthru
      _
    // Predicated region
    $region10: #{mlp_three.1} parent=1 // pred_check
      _
    $region11: #{mlp_three.1} parent=1 // pred_check_branch
      %34 = sbr.rel (0) target = $region13
    $region12: #{mlp_three.1} parent=1 // pred_region
      %s36 = ssub.s32 4096, 4096
      %37 = vsyncadd [#allocation6], %s36
      %s38 = sshll.u32 [#allocation7], 4
      %s39 = int_to_ptr.vmem [resolvable:$true] %s38
      %44 = dma.hbm_to_vmem [thread:$0]  %s2, 4096, %s39, [#allocation6], 64, 64, 4
    $region13: #{mlp_three.1} parent=1 // pred_fallthru
      _
    // Predicated region
    $region14: #{mlp_three.1} parent=1 // pred_check
      _
    $region15: #{mlp_three.1} parent=1 // pred_check_branch
      %46 = sbr.rel (0) target = $region17
    $region16: #{mlp_three.1} parent=1 // pred_region
      %47 = dma.done [#allocation3], 896
    $region17: #{mlp_three.1} parent=1 // pred_fallthru
      _
    // Predicated region
    $region18: #{mlp_three.1} parent=1 // pred_check
      _
    $region19: #{mlp_three.1} parent=1 // pred_check_branch
      %49 = sbr.rel (0) target = $region21
    $region20: #{mlp_three.1} parent=1 // pred_region
      %50 = dma.done [#allocation6], 25088
    $region21: #{mlp_three.1} parent=1 // pred_fallthru
      _
    // Predicated region
    $region22: #{mlp_three.1} parent=1 // pred_check
      _
    $region23: #{mlp_three.1} parent=1 // pred_check_branch
      %52 = sbr.rel (0) target = $region25
    $region24: #{mlp_three.1} parent=1 // pred_region
      %53 = dma.done [#allocation6], 4096
    $region25: #{mlp_three.1} parent=1 // pred_fallthru
      _
    %v55 = vld [vmem:[#allocation2] sm:$0xff]
    %v56 = vld [vmem:[#allocation2 + $0x8] sm:$0xff]
    %v57 = vld [vmem:[#allocation2 + $0x10] sm:$0xff]
    %v58 = vld [vmem:[#allocation2 + $0x18] sm:$0xff]
    %v59 = vld [vmem:[#allocation2 + $0x20] sm:$0xff]
    %v60 = vld [vmem:[#allocation2 + $0x28] sm:$0xff]
    %v61 = vld [vmem:[#allocation2 + $0x30] sm:$0xff]
    %v62 = vpack.c.bf16 %v55, %v55
    %v63 = vpack.c.bf16 %v56, %v56
    %v64 = vpack.c.bf16 %v57, %v57
    %v65 = vpack.c.bf16 %v58, %v58
    %v66 = vpack.c.bf16 %v59, %v59
    %v67 = vpack.c.bf16 %v60, %v60
    %v68 = vpack.c.bf16 %v61, %v61
    %v69 = vld [vmem:[#allocation5] sm:$0xff]
    %v70 = vld [vmem:[#allocation5 + $0x8] sm:$0xff]
    %v71 = vld [vmem:[#allocation5 + $0x10] sm:$0xff]
    %v72 = vld [vmem:[#allocation5 + $0x18] sm:$0xff]
    %v73 = vld [vmem:[#allocation5 + $0x20] sm:$0xff]
    %v74 = vld [vmem:[#allocation5 + $0x28] sm:$0xff]
    %v75 = vld [vmem:[#allocation5 + $0x30] sm:$0xff]
    %v76 = vld [vmem:[#allocation5 + $0x38] sm:$0xff]
    %v77 = vld [vmem:[#allocation5 + $0x40] sm:$0xff]
    %v78 = vld [vmem:[#allocation5 + $0x48] sm:$0xff]
    %v79 = vld [vmem:[#allocation5 + $0x50] sm:$0xff]
    %v80 = vld [vmem:[#allocation5 + $0x58] sm:$0xff]
    %v81 = vld [vmem:[#allocation5 + $0x60] sm:$0xff]
    %v82 = vld [vmem:[#allocation5 + $0x68] sm:$0xff]
    %v83 = vld [vmem:[#allocation5 + $0x70] sm:$0xff]
    %v84 = vld [vmem:[#allocation5 + $0x78] sm:$0xff]
    %v85 = vld [vmem:[#allocation5 + $0x80] sm:$0xff]
    %v86 = vld [vmem:[#allocation5 + $0x88] sm:$0xff]
    %v87 = vld [vmem:[#allocation5 + $0x90] sm:$0xff]
    %v88 = vld [vmem:[#allocation5 + $0x98] sm:$0xff]
    %v89 = vld [vmem:[#allocation5 + $0xa0] sm:$0xff]
    %v90 = vld [vmem:[#allocation5 + $0xa8] sm:$0xff]
    %v91 = vld [vmem:[#allocation5 + $0xb0] sm:$0xff]
    %v92 = vld [vmem:[#allocation5 + $0xb8] sm:$0xff]
    %v93 = vld [vmem:[#allocation5 + $0xc0] sm:$0xff]
    %v94 = vld [vmem:[#allocation5 + $0xc8] sm:$0xff]
    %v95 = vld [vmem:[#allocation5 + $0xd0] sm:$0xff]
    %v96 = vld [vmem:[#allocation5 + $0xd8] sm:$0xff]
    %v97 = vld [vmem:[#allocation5 + $0xe0] sm:$0xff]
    %v98 = vld [vmem:[#allocation5 + $0xe8] sm:$0xff]
    %v99 = vld [vmem:[#allocation5 + $0xf0] sm:$0xff]
    %v100 = vld [vmem:[#allocation5 + $0xf8] sm:$0xff]
    %v101 = vld [vmem:[#allocation5 + $0x100] sm:$0xff]
    %v102 = vld [vmem:[#allocation5 + $0x108] sm:$0xff]
    %v103 = vld [vmem:[#allocation5 + $0x110] sm:$0xff]
    %v104 = vld [vmem:[#allocation5 + $0x118] sm:$0xff]
    %v105 = vld [vmem:[#allocation5 + $0x120] sm:$0xff]
    %v106 = vld [vmem:[#allocation5 + $0x128] sm:$0xff]
    %v107 = vld [vmem:[#allocation5 + $0x130] sm:$0xff]
    %v108 = vld [vmem:[#allocation5 + $0x138] sm:$0xff]
    %v109 = vld [vmem:[#allocation5 + $0x140] sm:$0xff]
    %v110 = vld [vmem:[#allocation5 + $0x148] sm:$0xff]
    %v111 = vld [vmem:[#allocation5 + $0x150] sm:$0xff]
    %v112 = vld [vmem:[#allocation5 + $0x158] sm:$0xff]
    %v113 = vld [vmem:[#allocation5 + $0x160] sm:$0xff]
    %v114 = vld [vmem:[#allocation5 + $0x168] sm:$0xff]
    %v115 = vld [vmem:[#allocation5 + $0x170] sm:$0xff]
    %v116 = vld [vmem:[#allocation5 + $0x178] sm:$0xff]
    %v117 = vld [vmem:[#allocation5 + $0x180] sm:$0xff]
    %v118 = vld [vmem:[#allocation5 + $0x188] sm:$0xff]
    %v119 = vld [vmem:[#allocation5 + $0x190] sm:$0xff]
    %v120 = vld [vmem:[#allocation5 + $0x198] sm:$0xff]
    %v121 = vld [vmem:[#allocation5 + $0x1a0] sm:$0xff]
    %v122 = vld [vmem:[#allocation5 + $0x1a8] sm:$0xff]
    %v123 = vld [vmem:[#allocation5 + $0x1b0] sm:$0xff]
    %v124 = vld [vmem:[#allocation5 + $0x1b8] sm:$0xff]
    %v125 = vld [vmem:[#allocation5 + $0x1c0] sm:$0xff]
    %v126 = vld [vmem:[#allocation5 + $0x1c8] sm:$0xff]
    %v127 = vld [vmem:[#allocation5 + $0x1d0] sm:$0xff]
    %v128 = vld [vmem:[#allocation5 + $0x1d8] sm:$0xff]
    %v129 = vld [vmem:[#allocation5 + $0x1e0] sm:$0xff]
    %v130 = vld [vmem:[#allocation5 + $0x1e8] sm:$0xff]
    %v131 = vld [vmem:[#allocation5 + $0x1f0] sm:$0xff]
    %v132 = vld [vmem:[#allocation5 + $0x1f8] sm:$0xff]
    %v133 = vld [vmem:[#allocation5 + $0x200] sm:$0xff]
    %v134 = vld [vmem:[#allocation5 + $0x208] sm:$0xff]
    %v135 = vld [vmem:[#allocation5 + $0x210] sm:$0xff]
    %v136 = vld [vmem:[#allocation5 + $0x218] sm:$0xff]
    %v137 = vld [vmem:[#allocation5 + $0x220] sm:$0xff]
    %v138 = vld [vmem:[#allocation5 + $0x228] sm:$0xff]
    %v139 = vld [vmem:[#allocation5 + $0x230] sm:$0xff]
    %v140 = vld [vmem:[#allocation5 + $0x238] sm:$0xff]
    %v141 = vld [vmem:[#allocation5 + $0x240] sm:$0xff]
    %v142 = vld [vmem:[#allocation5 + $0x248] sm:$0xff]
    %v143 = vld [vmem:[#allocation5 + $0x250] sm:$0xff]
    %v144 = vld [vmem:[#allocation5 + $0x258] sm:$0xff]
    %v145 = vld [vmem:[#allocation5 + $0x260] sm:$0xff]
    %v146 = vld [vmem:[#allocation5 + $0x268] sm:$0xff]
    %v147 = vld [vmem:[#allocation5 + $0x270] sm:$0xff]
    %v148 = vld [vmem:[#allocation5 + $0x278] sm:$0xff]
    %v149 = vld [vmem:[#allocation5 + $0x280] sm:$0xff]
    %v150 = vld [vmem:[#allocation5 + $0x288] sm:$0xff]
    %v151 = vld [vmem:[#allocation5 + $0x290] sm:$0xff]
    %v152 = vld [vmem:[#allocation5 + $0x298] sm:$0xff]
    %v153 = vld [vmem:[#allocation5 + $0x2a0] sm:$0xff]
    %v154 = vld [vmem:[#allocation5 + $0x2a8] sm:$0xff]
    %v155 = vld [vmem:[#allocation5 + $0x2b0] sm:$0xff]
    %v156 = vld [vmem:[#allocation5 + $0x2b8] sm:$0xff]
    %v157 = vld [vmem:[#allocation5 + $0x2c0] sm:$0xff]
    %v158 = vld [vmem:[#allocation5 + $0x2c8] sm:$0xff]
    %v159 = vld [vmem:[#allocation5 + $0x2d0] sm:$0xff]
    %v160 = vld [vmem:[#allocation5 + $0x2d8] sm:$0xff]
    %v161 = vld [vmem:[#allocation5 + $0x2e0] sm:$0xff]
    %v162 = vld [vmem:[#allocation5 + $0x2e8] sm:$0xff]
    %v163 = vld [vmem:[#allocation5 + $0x2f0] sm:$0xff]
    %v164 = vld [vmem:[#allocation5 + $0x2f8] sm:$0xff]
    %v165 = vld [vmem:[#allocation5 + $0x300] sm:$0xff]
    %v166 = vld [vmem:[#allocation5 + $0x308] sm:$0xff]
    %v167 = vld [vmem:[#allocation5 + $0x310] sm:$0xff]
    %v168 = vld [vmem:[#allocation5 + $0x318] sm:$0xff]
    %v169 = vld [vmem:[#allocation5 + $0x320] sm:$0xff]
    %v170 = vld [vmem:[#allocation5 + $0x328] sm:$0xff]
    %v171 = vld [vmem:[#allocation5 + $0x330] sm:$0xff]
    %v172 = vld [vmem:[#allocation5 + $0x338] sm:$0xff]
    %v173 = vld [vmem:[#allocation5 + $0x340] sm:$0xff]
    %v174 = vld [vmem:[#allocation5 + $0x348] sm:$0xff]
    %v175 = vld [vmem:[#allocation5 + $0x350] sm:$0xff]
    %v176 = vld [vmem:[#allocation5 + $0x358] sm:$0xff]
    %v177 = vld [vmem:[#allocation5 + $0x360] sm:$0xff]
    %v178 = vld [vmem:[#allocation5 + $0x368] sm:$0xff]
    %v179 = vld [vmem:[#allocation5 + $0x370] sm:$0xff]
    %v180 = vld [vmem:[#allocation5 + $0x378] sm:$0xff]
    %v181 = vld [vmem:[#allocation5 + $0x380] sm:$0xff]
    %v182 = vld [vmem:[#allocation5 + $0x388] sm:$0xff]
    %v183 = vld [vmem:[#allocation5 + $0x390] sm:$0xff]
    %v184 = vld [vmem:[#allocation5 + $0x398] sm:$0xff]
    %v185 = vld [vmem:[#allocation5 + $0x3a0] sm:$0xff]
    %v186 = vld [vmem:[#allocation5 + $0x3a8] sm:$0xff]
    %v187 = vld [vmem:[#allocation5 + $0x3b0] sm:$0xff]
    %v188 = vld [vmem:[#allocation5 + $0x3b8] sm:$0xff]
    %v189 = vld [vmem:[#allocation5 + $0x3c0] sm:$0xff]
    %v190 = vld [vmem:[#allocation5 + $0x3c8] sm:$0xff]
    %v191 = vld [vmem:[#allocation5 + $0x3d0] sm:$0xff]
    %v192 = vld [vmem:[#allocation5 + $0x3d8] sm:$0xff]
    %v193 = vld [vmem:[#allocation5 + $0x3e0] sm:$0xff]
    %v194 = vld [vmem:[#allocation5 + $0x3e8] sm:$0xff]
    %v195 = vld [vmem:[#allocation5 + $0x3f0] sm:$0xff]
    %v196 = vld [vmem:[#allocation5 + $0x3f8] sm:$0xff]
    %v197 = vld [vmem:[#allocation5 + $0x400] sm:$0xff]
    %v198 = vld [vmem:[#allocation5 + $0x408] sm:$0xff]
    %v199 = vld [vmem:[#allocation5 + $0x410] sm:$0xff]
    %v200 = vld [vmem:[#allocation5 + $0x418] sm:$0xff]
    %v201 = vld [vmem:[#allocation5 + $0x420] sm:$0xff]
    %v202 = vld [vmem:[#allocation5 + $0x428] sm:$0xff]
    %v203 = vld [vmem:[#allocation5 + $0x430] sm:$0xff]
    %v204 = vld [vmem:[#allocation5 + $0x438] sm:$0xff]
    %v205 = vld [vmem:[#allocation5 + $0x440] sm:$0xff]
    %v206 = vld [vmem:[#allocation5 + $0x448] sm:$0xff]
    %v207 = vld [vmem:[#allocation5 + $0x450] sm:$0xff]
    %v208 = vld [vmem:[#allocation5 + $0x458] sm:$0xff]
    %v209 = vld [vmem:[#allocation5 + $0x460] sm:$0xff]
    %v210 = vld [vmem:[#allocation5 + $0x468] sm:$0xff]
    %v211 = vld [vmem:[#allocation5 + $0x470] sm:$0xff]
    %v212 = vld [vmem:[#allocation5 + $0x478] sm:$0xff]
    %v213 = vld [vmem:[#allocation5 + $0x480] sm:$0xff]
    %v214 = vld [vmem:[#allocation5 + $0x488] sm:$0xff]
    %v215 = vld [vmem:[#allocation5 + $0x490] sm:$0xff]
    %v216 = vld [vmem:[#allocation5 + $0x498] sm:$0xff]
    %v217 = vld [vmem:[#allocation5 + $0x4a0] sm:$0xff]
    %v218 = vld [vmem:[#allocation5 + $0x4a8] sm:$0xff]
    %v219 = vld [vmem:[#allocation5 + $0x4b0] sm:$0xff]
    %v220 = vld [vmem:[#allocation5 + $0x4b8] sm:$0xff]
    %v221 = vld [vmem:[#allocation5 + $0x4c0] sm:$0xff]
    %v222 = vld [vmem:[#allocation5 + $0x4c8] sm:$0xff]
    %v223 = vld [vmem:[#allocation5 + $0x4d0] sm:$0xff]
    %v224 = vld [vmem:[#allocation5 + $0x4d8] sm:$0xff]
    %v225 = vld [vmem:[#allocation5 + $0x4e0] sm:$0xff]
    %v226 = vld [vmem:[#allocation5 + $0x4e8] sm:$0xff]
    %v227 = vld [vmem:[#allocation5 + $0x4f0] sm:$0xff]
    %v228 = vld [vmem:[#allocation5 + $0x4f8] sm:$0xff]
    %v229 = vld [vmem:[#allocation5 + $0x500] sm:$0xff]
    %v230 = vld [vmem:[#allocation5 + $0x508] sm:$0xff]
    %v231 = vld [vmem:[#allocation5 + $0x510] sm:$0xff]
    %v232 = vld [vmem:[#allocation5 + $0x518] sm:$0xff]
    %v233 = vld [vmem:[#allocation5 + $0x520] sm:$0xff]
    %v234 = vld [vmem:[#allocation5 + $0x528] sm:$0xff]
    %v235 = vld [vmem:[#allocation5 + $0x530] sm:$0xff]
    %v236 = vld [vmem:[#allocation5 + $0x538] sm:$0xff]
    %v237 = vld [vmem:[#allocation5 + $0x540] sm:$0xff]
    %v238 = vld [vmem:[#allocation5 + $0x548] sm:$0xff]
    %v239 = vld [vmem:[#allocation5 + $0x550] sm:$0xff]
    %v240 = vld [vmem:[#allocation5 + $0x558] sm:$0xff]
    %v241 = vld [vmem:[#allocation5 + $0x560] sm:$0xff]
    %v242 = vld [vmem:[#allocation5 + $0x568] sm:$0xff]
    %v243 = vld [vmem:[#allocation5 + $0x570] sm:$0xff]
    %v244 = vld [vmem:[#allocation5 + $0x578] sm:$0xff]
    %v245 = vld [vmem:[#allocation5 + $0x580] sm:$0xff]
    %v246 = vld [vmem:[#allocation5 + $0x588] sm:$0xff]
    %v247 = vld [vmem:[#allocation5 + $0x590] sm:$0xff]
    %v248 = vld [vmem:[#allocation5 + $0x598] sm:$0xff]
    %v249 = vld [vmem:[#allocation5 + $0x5a0] sm:$0xff]
    %v250 = vld [vmem:[#allocation5 + $0x5a8] sm:$0xff]
    %v251 = vld [vmem:[#allocation5 + $0x5b0] sm:$0xff]
    %v252 = vld [vmem:[#allocation5 + $0x5b8] sm:$0xff]
    %v253 = vld [vmem:[#allocation5 + $0x5c0] sm:$0xff]
    %v254 = vld [vmem:[#allocation5 + $0x5c8] sm:$0xff]
    %v255 = vld [vmem:[#allocation5 + $0x5d0] sm:$0xff]
    %v256 = vld [vmem:[#allocation5 + $0x5d8] sm:$0xff]
    %v257 = vld [vmem:[#allocation5 + $0x5e0] sm:$0xff]
    %v258 = vld [vmem:[#allocation5 + $0x5e8] sm:$0xff]
    %v259 = vld [vmem:[#allocation5 + $0x5f0] sm:$0xff]
    %v260 = vld [vmem:[#allocation5 + $0x5f8] sm:$0xff]
    %v261 = vld [vmem:[#allocation5 + $0x600] sm:$0xff]
    %v262 = vld [vmem:[#allocation5 + $0x608] sm:$0xff]
    %v263 = vld [vmem:[#allocation5 + $0x610] sm:$0xff]
    %v264 = vld [vmem:[#allocation5 + $0x618] sm:$0xff]
    %v461 = vunpack.c.l.b16 %v69
    %v462 = vunpack.c.h.b16 %v69
    %v463 = vunpack.c.l.b16 %v70
    %v464 = vunpack.c.h.b16 %v70
    %v465 = vunpack.c.l.b16 %v71
    %v466 = vunpack.c.h.b16 %v71
    %v467 = vunpack.c.l.b16 %v72
    %v468 = vunpack.c.h.b16 %v72
    %v469 = vunpack.c.l.b16 %v73
    %v470 = vunpack.c.h.b16 %v73
    %v471 = vunpack.c.l.b16 %v74
    %v472 = vunpack.c.h.b16 %v74
    %v473 = vunpack.c.l.b16 %v75
    %v474 = vunpack.c.h.b16 %v75
    %v475 = vunpack.c.l.b16 %v76
    %v476 = vunpack.c.h.b16 %v76
    %v477 = vunpack.c.l.b16 %v77
    %v478 = vunpack.c.h.b16 %v77
    %v479 = vunpack.c.l.b16 %v78
    %v480 = vunpack.c.h.b16 %v78
    %v481 = vunpack.c.l.b16 %v79
    %v482 = vunpack.c.h.b16 %v79
    %v483 = vunpack.c.l.b16 %v80
    %v484 = vunpack.c.h.b16 %v80
    %v485 = vunpack.c.l.b16 %v81
    %v486 = vunpack.c.h.b16 %v81
    %v487 = vunpack.c.l.b16 %v82
    %v488 = vunpack.c.h.b16 %v82
    %v489 = vunpack.c.l.b16 %v83
    %v490 = vunpack.c.h.b16 %v83
    %v491 = vunpack.c.l.b16 %v84
    %v492 = vunpack.c.h.b16 %v84
    %v493 = vunpack.c.l.b16 %v85
    %v494 = vunpack.c.h.b16 %v85
    %v495 = vunpack.c.l.b16 %v86
    %v496 = vunpack.c.h.b16 %v86
    %v497 = vunpack.c.l.b16 %v87
    %v498 = vunpack.c.h.b16 %v87
    %v499 = vunpack.c.l.b16 %v88
    %v500 = vunpack.c.h.b16 %v88
    %v501 = vunpack.c.l.b16 %v89
    %v502 = vunpack.c.h.b16 %v89
    %v503 = vunpack.c.l.b16 %v90
    %v504 = vunpack.c.h.b16 %v90
    %v505 = vunpack.c.l.b16 %v91
    %v506 = vunpack.c.h.b16 %v91
    %v507 = vunpack.c.l.b16 %v92
    %v508 = vunpack.c.h.b16 %v92
    %v509 = vunpack.c.l.b16 %v93
    %v510 = vunpack.c.h.b16 %v93
    %v511 = vunpack.c.l.b16 %v94
    %v512 = vunpack.c.h.b16 %v94
    %v513 = vunpack.c.l.b16 %v95
    %v514 = vunpack.c.h.b16 %v95
    %v515 = vunpack.c.l.b16 %v96
    %v516 = vunpack.c.h.b16 %v96
    %v517 = vunpack.c.l.b16 %v97
    %v518 = vunpack.c.h.b16 %v97
    %v519 = vunpack.c.l.b16 %v98
    %v520 = vunpack.c.h.b16 %v98
    %v521 = vunpack.c.l.b16 %v99
    %v522 = vunpack.c.h.b16 %v99
    %v523 = vunpack.c.l.b16 %v100
    %v524 = vunpack.c.h.b16 %v100
    %v525 = vunpack.c.l.b16 %v101
    %v526 = vunpack.c.h.b16 %v101
    %v527 = vunpack.c.l.b16 %v102
    %v528 = vunpack.c.h.b16 %v102
    %v529 = vunpack.c.l.b16 %v103
    %v530 = vunpack.c.h.b16 %v103
    %v531 = vunpack.c.l.b16 %v104
    %v532 = vunpack.c.h.b16 %v104
    %v533 = vunpack.c.l.b16 %v105
    %v534 = vunpack.c.h.b16 %v105
    %v535 = vunpack.c.l.b16 %v106
    %v536 = vunpack.c.h.b16 %v106
    %v537 = vunpack.c.l.b16 %v107
    %v538 = vunpack.c.h.b16 %v107
    %v539 = vunpack.c.l.b16 %v108
    %v540 = vunpack.c.h.b16 %v108
    %v541 = vunpack.c.l.b16 %v109
    %v542 = vunpack.c.h.b16 %v109
    %v543 = vunpack.c.l.b16 %v110
    %v544 = vunpack.c.h.b16 %v110
    %v545 = vunpack.c.l.b16 %v111
    %v546 = vunpack.c.h.b16 %v111
    %v547 = vunpack.c.l.b16 %v112
    %v548 = vunpack.c.h.b16 %v112
    %v549 = vunpack.c.l.b16 %v113
    %v550 = vunpack.c.h.b16 %v113
    %v551 = vunpack.c.l.b16 %v114
    %v552 = vunpack.c.h.b16 %v114
    %v553 = vunpack.c.l.b16 %v115
    %v554 = vunpack.c.h.b16 %v115
    %v555 = vunpack.c.l.b16 %v116
    %v556 = vunpack.c.h.b16 %v116
    %v557 = vunpack.c.l.b16 %v117
    %v558 = vunpack.c.h.b16 %v117
    %v559 = vunpack.c.l.b16 %v118
    %v560 = vunpack.c.h.b16 %v118
    %v561 = vunpack.c.l.b16 %v119
    %v562 = vunpack.c.h.b16 %v119
    %v563 = vunpack.c.l.b16 %v120
    %v564 = vunpack.c.h.b16 %v120
    %v565 = vunpack.c.l.b16 %v121
    %v566 = vunpack.c.h.b16 %v121
    %v567 = vunpack.c.l.b16 %v122
    %v568 = vunpack.c.h.b16 %v122
    %v569 = vunpack.c.l.b16 %v123
    %v570 = vunpack.c.h.b16 %v123
    %v571 = vunpack.c.l.b16 %v124
    %v572 = vunpack.c.h.b16 %v124
    %v573 = vunpack.c.l.b16 %v125
    %v574 = vunpack.c.h.b16 %v125
    %v575 = vunpack.c.l.b16 %v126
    %v576 = vunpack.c.h.b16 %v126
    %v577 = vunpack.c.l.b16 %v127
    %v578 = vunpack.c.h.b16 %v127
    %v579 = vunpack.c.l.b16 %v128
    %v580 = vunpack.c.h.b16 %v128
    %v581 = vunpack.c.l.b16 %v129
    %v582 = vunpack.c.h.b16 %v129
    %v583 = vunpack.c.l.b16 %v130
    %v584 = vunpack.c.h.b16 %v130
    %v585 = vunpack.c.l.b16 %v131
    %v586 = vunpack.c.h.b16 %v131
    %v587 = vunpack.c.l.b16 %v132
    %v588 = vunpack.c.h.b16 %v132
    %v589 = vunpack.c.l.b16 %v133
    %v590 = vunpack.c.h.b16 %v133
    %v591 = vunpack.c.l.b16 %v134
    %v592 = vunpack.c.h.b16 %v134
    %v593 = vunpack.c.l.b16 %v135
    %v594 = vunpack.c.h.b16 %v135
    %v595 = vunpack.c.l.b16 %v136
    %v596 = vunpack.c.h.b16 %v136
    %v597 = vunpack.c.l.b16 %v137
    %v598 = vunpack.c.h.b16 %v137
    %v599 = vunpack.c.l.b16 %v138
    %v600 = vunpack.c.h.b16 %v138
    %v601 = vunpack.c.l.b16 %v139
    %v602 = vunpack.c.h.b16 %v139
    %v603 = vunpack.c.l.b16 %v140
    %v604 = vunpack.c.h.b16 %v140
    %v605 = vunpack.c.l.b16 %v141
    %v606 = vunpack.c.h.b16 %v141
    %v607 = vunpack.c.l.b16 %v142
    %v608 = vunpack.c.h.b16 %v142
    %v609 = vunpack.c.l.b16 %v143
    %v610 = vunpack.c.h.b16 %v143
    %v611 = vunpack.c.l.b16 %v144
    %v612 = vunpack.c.h.b16 %v144
    %v613 = vunpack.c.l.b16 %v145
    %v614 = vunpack.c.h.b16 %v145
    %v615 = vunpack.c.l.b16 %v146
    %v616 = vunpack.c.h.b16 %v146
    %v617 = vunpack.c.l.b16 %v147
    %v618 = vunpack.c.h.b16 %v147
    %v619 = vunpack.c.l.b16 %v148
    %v620 = vunpack.c.h.b16 %v148
    %v621 = vunpack.c.l.b16 %v149
    %v622 = vunpack.c.h.b16 %v149
    %v623 = vunpack.c.l.b16 %v150
    %v624 = vunpack.c.h.b16 %v150
    %v625 = vunpack.c.l.b16 %v151
    %v626 = vunpack.c.h.b16 %v151
    %v627 = vunpack.c.l.b16 %v152
    %v628 = vunpack.c.h.b16 %v152
    %v629 = vunpack.c.l.b16 %v153
    %v630 = vunpack.c.h.b16 %v153
    %v631 = vunpack.c.l.b16 %v154
    %v632 = vunpack.c.h.b16 %v154
    %v633 = vunpack.c.l.b16 %v155
    %v634 = vunpack.c.h.b16 %v155
    %v635 = vunpack.c.l.b16 %v156
    %v636 = vunpack.c.h.b16 %v156
    %v637 = vunpack.c.l.b16 %v157
    %v638 = vunpack.c.h.b16 %v157
    %v639 = vunpack.c.l.b16 %v158
    %v640 = vunpack.c.h.b16 %v158
    %v641 = vunpack.c.l.b16 %v159
    %v642 = vunpack.c.h.b16 %v159
    %v643 = vunpack.c.l.b16 %v160
    %v644 = vunpack.c.h.b16 %v160
    %v645 = vunpack.c.l.b16 %v161
    %v646 = vunpack.c.h.b16 %v161
    %v647 = vunpack.c.l.b16 %v162
    %v648 = vunpack.c.h.b16 %v162
    %v649 = vunpack.c.l.b16 %v163
    %v650 = vunpack.c.h.b16 %v163
    %v651 = vunpack.c.l.b16 %v164
    %v652 = vunpack.c.h.b16 %v164
    %v653 = vunpack.c.l.b16 %v165
    %v654 = vunpack.c.h.b16 %v165
    %v655 = vunpack.c.l.b16 %v166
    %v656 = vunpack.c.h.b16 %v166
    %v657 = vunpack.c.l.b16 %v167
    %v658 = vunpack.c.h.b16 %v167
    %v659 = vunpack.c.l.b16 %v168
    %v660 = vunpack.c.h.b16 %v168
    %v661 = vunpack.c.l.b16 %v169
    %v662 = vunpack.c.h.b16 %v169
    %v663 = vunpack.c.l.b16 %v170
    %v664 = vunpack.c.h.b16 %v170
    %v665 = vunpack.c.l.b16 %v171
    %v666 = vunpack.c.h.b16 %v171
    %v667 = vunpack.c.l.b16 %v172
    %v668 = vunpack.c.h.b16 %v172
    %v669 = vunpack.c.l.b16 %v173
    %v670 = vunpack.c.h.b16 %v173
    %v671 = vunpack.c.l.b16 %v174
    %v672 = vunpack.c.h.b16 %v174
    %v673 = vunpack.c.l.b16 %v175
    %v674 = vunpack.c.h.b16 %v175
    %v675 = vunpack.c.l.b16 %v176
    %v676 = vunpack.c.h.b16 %v176
    %v677 = vunpack.c.l.b16 %v177
    %v678 = vunpack.c.h.b16 %v177
    %v679 = vunpack.c.l.b16 %v178
    %v680 = vunpack.c.h.b16 %v178
    %v681 = vunpack.c.l.b16 %v179
    %v682 = vunpack.c.h.b16 %v179
    %v683 = vunpack.c.l.b16 %v180
    %v684 = vunpack.c.h.b16 %v180
    %v685 = vunpack.c.l.b16 %v181
    %v686 = vunpack.c.h.b16 %v181
    %v687 = vunpack.c.l.b16 %v182
    %v688 = vunpack.c.h.b16 %v182
    %v689 = vunpack.c.l.b16 %v183
    %v690 = vunpack.c.h.b16 %v183
    %v691 = vunpack.c.l.b16 %v184
    %v692 = vunpack.c.h.b16 %v184
    %v693 = vunpack.c.l.b16 %v185
    %v694 = vunpack.c.h.b16 %v185
    %v695 = vunpack.c.l.b16 %v186
    %v696 = vunpack.c.h.b16 %v186
    %v697 = vunpack.c.l.b16 %v187
    %v698 = vunpack.c.h.b16 %v187
    %v699 = vunpack.c.l.b16 %v188
    %v700 = vunpack.c.h.b16 %v188
    %v701 = vunpack.c.l.b16 %v189
    %v702 = vunpack.c.h.b16 %v189
    %v703 = vunpack.c.l.b16 %v190
    %v704 = vunpack.c.h.b16 %v190
    %v705 = vunpack.c.l.b16 %v191
    %v706 = vunpack.c.h.b16 %v191
    %v707 = vunpack.c.l.b16 %v192
    %v708 = vunpack.c.h.b16 %v192
    %v709 = vunpack.c.l.b16 %v193
    %v710 = vunpack.c.h.b16 %v193
    %v711 = vunpack.c.l.b16 %v194
    %v712 = vunpack.c.h.b16 %v194
    %v713 = vunpack.c.l.b16 %v195
    %v714 = vunpack.c.h.b16 %v195
    %v715 = vunpack.c.l.b16 %v196
    %v716 = vunpack.c.h.b16 %v196
    %v717 = vunpack.c.l.b16 %v197
    %v718 = vunpack.c.h.b16 %v197
    %v719 = vunpack.c.l.b16 %v198
    %v720 = vunpack.c.h.b16 %v198
    %v721 = vunpack.c.l.b16 %v199
    %v722 = vunpack.c.h.b16 %v199
    %v723 = vunpack.c.l.b16 %v200
    %v724 = vunpack.c.h.b16 %v200
    %v725 = vunpack.c.l.b16 %v201
    %v726 = vunpack.c.h.b16 %v201
    %v727 = vunpack.c.l.b16 %v202
    %v728 = vunpack.c.h.b16 %v202
    %v729 = vunpack.c.l.b16 %v203
    %v730 = vunpack.c.h.b16 %v203
    %v731 = vunpack.c.l.b16 %v204
    %v732 = vunpack.c.h.b16 %v204
    %v733 = vunpack.c.l.b16 %v205
    %v734 = vunpack.c.h.b16 %v205
    %v735 = vunpack.c.l.b16 %v206
    %v736 = vunpack.c.h.b16 %v206
    %v737 = vunpack.c.l.b16 %v207
    %v738 = vunpack.c.h.b16 %v207
    %v739 = vunpack.c.l.b16 %v208
    %v740 = vunpack.c.h.b16 %v208
    %v741 = vunpack.c.l.b16 %v209
    %v742 = vunpack.c.h.b16 %v209
    %v743 = vunpack.c.l.b16 %v210
    %v744 = vunpack.c.h.b16 %v210
    %v745 = vunpack.c.l.b16 %v211
    %v746 = vunpack.c.h.b16 %v211
    %v747 = vunpack.c.l.b16 %v212
    %v748 = vunpack.c.h.b16 %v212
    %v749 = vunpack.c.l.b16 %v213
    %v750 = vunpack.c.h.b16 %v213
    %v751 = vunpack.c.l.b16 %v214
    %v752 = vunpack.c.h.b16 %v214
    %v753 = vunpack.c.l.b16 %v215
    %v754 = vunpack.c.h.b16 %v215
    %v755 = vunpack.c.l.b16 %v216
    %v756 = vunpack.c.h.b16 %v216
    %v757 = vunpack.c.l.b16 %v217
    %v758 = vunpack.c.h.b16 %v217
    %v759 = vunpack.c.l.b16 %v218
    %v760 = vunpack.c.h.b16 %v218
    %v761 = vunpack.c.l.b16 %v219
    %v762 = vunpack.c.h.b16 %v219
    %v763 = vunpack.c.l.b16 %v220
    %v764 = vunpack.c.h.b16 %v220
    %v765 = vunpack.c.l.b16 %v221
    %v766 = vunpack.c.h.b16 %v221
    %v767 = vunpack.c.l.b16 %v222
    %v768 = vunpack.c.h.b16 %v222
    %v769 = vunpack.c.l.b16 %v223
    %v770 = vunpack.c.h.b16 %v223
    %v771 = vunpack.c.l.b16 %v224
    %v772 = vunpack.c.h.b16 %v224
    %v773 = vunpack.c.l.b16 %v225
    %v774 = vunpack.c.h.b16 %v225
    %v775 = vunpack.c.l.b16 %v226
    %v776 = vunpack.c.h.b16 %v226
    %v777 = vunpack.c.l.b16 %v227
    %v778 = vunpack.c.h.b16 %v227
    %v779 = vunpack.c.l.b16 %v228
    %v780 = vunpack.c.h.b16 %v228
    %v781 = vunpack.c.l.b16 %v229
    %v782 = vunpack.c.h.b16 %v229
    %v783 = vunpack.c.l.b16 %v230
    %v784 = vunpack.c.h.b16 %v230
    %v785 = vunpack.c.l.b16 %v231
    %v786 = vunpack.c.h.b16 %v231
    %v787 = vunpack.c.l.b16 %v232
    %v788 = vunpack.c.h.b16 %v232
    %v789 = vunpack.c.l.b16 %v233
    %v790 = vunpack.c.h.b16 %v233
    %v791 = vunpack.c.l.b16 %v234
    %v792 = vunpack.c.h.b16 %v234
    %v793 = vunpack.c.l.b16 %v235
    %v794 = vunpack.c.h.b16 %v235
    %v795 = vunpack.c.l.b16 %v236
    %v796 = vunpack.c.h.b16 %v236
    %v797 = vunpack.c.l.b16 %v237
    %v798 = vunpack.c.h.b16 %v237
    %v799 = vunpack.c.l.b16 %v238
    %v800 = vunpack.c.h.b16 %v238
    %v801 = vunpack.c.l.b16 %v239
    %v802 = vunpack.c.h.b16 %v239
    %v803 = vunpack.c.l.b16 %v240
    %v804 = vunpack.c.h.b16 %v240
    %v805 = vunpack.c.l.b16 %v241
    %v806 = vunpack.c.h.b16 %v241
    %v807 = vunpack.c.l.b16 %v242
    %v808 = vunpack.c.h.b16 %v242
    %v809 = vunpack.c.l.b16 %v243
    %v810 = vunpack.c.h.b16 %v243
    %v811 = vunpack.c.l.b16 %v244
    %v812 = vunpack.c.h.b16 %v244
    %v813 = vunpack.c.l.b16 %v245
    %v814 = vunpack.c.h.b16 %v245
    %v815 = vunpack.c.l.b16 %v246
    %v816 = vunpack.c.h.b16 %v246
    %v817 = vunpack.c.l.b16 %v247
    %v818 = vunpack.c.h.b16 %v247
    %v819 = vunpack.c.l.b16 %v248
    %v820 = vunpack.c.h.b16 %v248
    %v821 = vunpack.c.l.b16 %v249
    %v822 = vunpack.c.h.b16 %v249
    %v823 = vunpack.c.l.b16 %v250
    %v824 = vunpack.c.h.b16 %v250
    %v825 = vunpack.c.l.b16 %v251
    %v826 = vunpack.c.h.b16 %v251
    %v827 = vunpack.c.l.b16 %v252
    %v828 = vunpack.c.h.b16 %v252
    %v829 = vunpack.c.l.b16 %v253
    %v830 = vunpack.c.h.b16 %v253
    %v831 = vunpack.c.l.b16 %v254
    %v832 = vunpack.c.h.b16 %v254
    %v833 = vunpack.c.l.b16 %v255
    %v834 = vunpack.c.h.b16 %v255
    %v835 = vunpack.c.l.b16 %v256
    %v836 = vunpack.c.h.b16 %v256
    %v837 = vunpack.c.l.b16 %v257
    %v838 = vunpack.c.h.b16 %v257
    %v839 = vunpack.c.l.b16 %v258
    %v840 = vunpack.c.h.b16 %v258
    %v841 = vunpack.c.l.b16 %v259
    %v842 = vunpack.c.h.b16 %v259
    %v843 = vunpack.c.l.b16 %v260
    %v844 = vunpack.c.h.b16 %v260
    %v845 = vunpack.c.l.b16 %v261
    %v846 = vunpack.c.h.b16 %v261
    %v847 = vunpack.c.l.b16 %v262
    %v848 = vunpack.c.h.b16 %v262
    %v849 = vunpack.c.l.b16 %v263
    %v850 = vunpack.c.h.b16 %v263
    %v851 = vunpack.c.l.b16 %v264
    %v852 = vunpack.c.h.b16 %v264
    %v853 = vpack.c.b16 %v465, %v461
    %v854 = vpack.c.b16 %v466, %v462
    %v855 = vpack.c.b16 %v467, %v463
    %v856 = vpack.c.b16 %v468, %v464
    %v857 = vpack.c.b16 %v473, %v469
    %v858 = vpack.c.b16 %v474, %v470
    %v859 = vpack.c.b16 %v475, %v471
    %v860 = vpack.c.b16 %v476, %v472
    %v861 = vpack.c.b16 %v481, %v477
    %v862 = vpack.c.b16 %v482, %v478
    %v863 = vpack.c.b16 %v483, %v479
    %v864 = vpack.c.b16 %v484, %v480
    %v865 = vpack.c.b16 %v489, %v485
    %v866 = vpack.c.b16 %v490, %v486
    %v867 = vpack.c.b16 %v491, %v487
    %v868 = vpack.c.b16 %v492, %v488
    %v869 = vpack.c.b16 %v497, %v493
    %v870 = vpack.c.b16 %v498, %v494
    %v871 = vpack.c.b16 %v499, %v495
    %v872 = vpack.c.b16 %v500, %v496
    %v873 = vpack.c.b16 %v505, %v501
    %v874 = vpack.c.b16 %v506, %v502
    %v875 = vpack.c.b16 %v507, %v503
    %v876 = vpack.c.b16 %v508, %v504
    %v877 = vpack.c.b16 %v513, %v509
    %v878 = vpack.c.b16 %v514, %v510
    %v879 = vpack.c.b16 %v515, %v511
    %v880 = vpack.c.b16 %v516, %v512
    %v881 = vpack.c.b16 %v521, %v517
    %v882 = vpack.c.b16 %v522, %v518
    %v883 = vpack.c.b16 %v523, %v519
    %v884 = vpack.c.b16 %v524, %v520
    %v885 = vpack.c.b16 %v529, %v525
    %v886 = vpack.c.b16 %v530, %v526
    %v887 = vpack.c.b16 %v531, %v527
    %v888 = vpack.c.b16 %v532, %v528
    %v889 = vpack.c.b16 %v537, %v533
    %v890 = vpack.c.b16 %v538, %v534
    %v891 = vpack.c.b16 %v539, %v535
    %v892 = vpack.c.b16 %v540, %v536
    %v893 = vpack.c.b16 %v545, %v541
    %v894 = vpack.c.b16 %v546, %v542
    %v895 = vpack.c.b16 %v547, %v543
    %v896 = vpack.c.b16 %v548, %v544
    %v897 = vpack.c.b16 %v553, %v549
    %v898 = vpack.c.b16 %v554, %v550
    %v899 = vpack.c.b16 %v555, %v551
    %v900 = vpack.c.b16 %v556, %v552
    %v901 = vpack.c.b16 %v561, %v557
    %v902 = vpack.c.b16 %v562, %v558
    %v903 = vpack.c.b16 %v563, %v559
    %v904 = vpack.c.b16 %v564, %v560
    %v905 = vpack.c.b16 %v569, %v565
    %v906 = vpack.c.b16 %v570, %v566
    %v907 = vpack.c.b16 %v571, %v567
    %v908 = vpack.c.b16 %v572, %v568
    %v909 = vpack.c.b16 %v577, %v573
    %v910 = vpack.c.b16 %v578, %v574
    %v911 = vpack.c.b16 %v579, %v575
    %v912 = vpack.c.b16 %v580, %v576
    %v913 = vpack.c.b16 %v585, %v581
    %v914 = vpack.c.b16 %v586, %v582
    %v915 = vpack.c.b16 %v587, %v583
    %v916 = vpack.c.b16 %v588, %v584
    %v917 = vpack.c.b16 %v593, %v589
    %v918 = vpack.c.b16 %v594, %v590
    %v919 = vpack.c.b16 %v595, %v591
    %v920 = vpack.c.b16 %v596, %v592
    %v921 = vpack.c.b16 %v601, %v597
    %v922 = vpack.c.b16 %v602, %v598
    %v923 = vpack.c.b16 %v603, %v599
    %v924 = vpack.c.b16 %v604, %v600
    %v925 = vpack.c.b16 %v609, %v605
    %v926 = vpack.c.b16 %v610, %v606
    %v927 = vpack.c.b16 %v611, %v607
    %v928 = vpack.c.b16 %v612, %v608
    %v929 = vpack.c.b16 %v617, %v613
    %v930 = vpack.c.b16 %v618, %v614
    %v931 = vpack.c.b16 %v619, %v615
    %v932 = vpack.c.b16 %v620, %v616
    %v933 = vpack.c.b16 %v625, %v621
    %v934 = vpack.c.b16 %v626, %v622
    %v935 = vpack.c.b16 %v627, %v623
    %v936 = vpack.c.b16 %v628, %v624
    %v937 = vpack.c.b16 %v633, %v629
    %v938 = vpack.c.b16 %v634, %v630
    %v939 = vpack.c.b16 %v635, %v631
    %v940 = vpack.c.b16 %v636, %v632
    %v941 = vpack.c.b16 %v641, %v637
    %v942 = vpack.c.b16 %v642, %v638
    %v943 = vpack.c.b16 %v643, %v639
    %v944 = vpack.c.b16 %v644, %v640
    %v945 = vpack.c.b16 %v649, %v645
    %v946 = vpack.c.b16 %v650, %v646
    %v947 = vpack.c.b16 %v651, %v647
    %v948 = vpack.c.b16 %v652, %v648
    %v949 = vpack.c.b16 %v657, %v653
    %v950 = vpack.c.b16 %v658, %v654
    %v951 = vpack.c.b16 %v659, %v655
    %v952 = vpack.c.b16 %v660, %v656
    %v953 = vpack.c.b16 %v665, %v661
    %v954 = vpack.c.b16 %v666, %v662
    %v955 = vpack.c.b16 %v667, %v663
    %v956 = vpack.c.b16 %v668, %v664
    %v957 = vpack.c.b16 %v673, %v669
    %v958 = vpack.c.b16 %v674, %v670
    %v959 = vpack.c.b16 %v675, %v671
    %v960 = vpack.c.b16 %v676, %v672
    %v961 = vpack.c.b16 %v681, %v677
    %v962 = vpack.c.b16 %v682, %v678
    %v963 = vpack.c.b16 %v683, %v679
    %v964 = vpack.c.b16 %v684, %v680
    %v965 = vpack.c.b16 %v689, %v685
    %v966 = vpack.c.b16 %v690, %v686
    %v967 = vpack.c.b16 %v691, %v687
    %v968 = vpack.c.b16 %v692, %v688
    %v969 = vpack.c.b16 %v697, %v693
    %v970 = vpack.c.b16 %v698, %v694
    %v971 = vpack.c.b16 %v699, %v695
    %v972 = vpack.c.b16 %v700, %v696
    %v973 = vpack.c.b16 %v705, %v701
    %v974 = vpack.c.b16 %v706, %v702
    %v975 = vpack.c.b16 %v707, %v703
    %v976 = vpack.c.b16 %v708, %v704
    %v977 = vpack.c.b16 %v713, %v709
    %v978 = vpack.c.b16 %v714, %v710
    %v979 = vpack.c.b16 %v715, %v711
    %v980 = vpack.c.b16 %v716, %v712
    %v981 = vpack.c.b16 %v721, %v717
    %v982 = vpack.c.b16 %v722, %v718
    %v983 = vpack.c.b16 %v723, %v719
    %v984 = vpack.c.b16 %v724, %v720
    %v985 = vpack.c.b16 %v729, %v725
    %v986 = vpack.c.b16 %v730, %v726
    %v987 = vpack.c.b16 %v731, %v727
    %v988 = vpack.c.b16 %v732, %v728
    %v989 = vpack.c.b16 %v737, %v733
    %v990 = vpack.c.b16 %v738, %v734
    %v991 = vpack.c.b16 %v739, %v735
    %v992 = vpack.c.b16 %v740, %v736
    %v993 = vpack.c.b16 %v745, %v741
    %v994 = vpack.c.b16 %v746, %v742
    %v995 = vpack.c.b16 %v747, %v743
    %v996 = vpack.c.b16 %v748, %v744
    %v997 = vpack.c.b16 %v753, %v749
    %v998 = vpack.c.b16 %v754, %v750
    %v999 = vpack.c.b16 %v755, %v751
    %v1000 = vpack.c.b16 %v756, %v752
    %v1001 = vpack.c.b16 %v761, %v757
    %v1002 = vpack.c.b16 %v762, %v758
    %v1003 = vpack.c.b16 %v763, %v759
    %v1004 = vpack.c.b16 %v764, %v760
    %v1005 = vpack.c.b16 %v769, %v765
    %v1006 = vpack.c.b16 %v770, %v766
    %v1007 = vpack.c.b16 %v771, %v767
    %v1008 = vpack.c.b16 %v772, %v768
    %v1009 = vpack.c.b16 %v777, %v773
    %v1010 = vpack.c.b16 %v778, %v774
    %v1011 = vpack.c.b16 %v779, %v775
    %v1012 = vpack.c.b16 %v780, %v776
    %v1013 = vpack.c.b16 %v785, %v781
    %v1014 = vpack.c.b16 %v786, %v782
    %v1015 = vpack.c.b16 %v787, %v783
    %v1016 = vpack.c.b16 %v788, %v784
    %v1017 = vpack.c.b16 %v793, %v789
    %v1018 = vpack.c.b16 %v794, %v790
    %v1019 = vpack.c.b16 %v795, %v791
    %v1020 = vpack.c.b16 %v796, %v792
    %v1021 = vpack.c.b16 %v801, %v797
    %v1022 = vpack.c.b16 %v802, %v798
    %v1023 = vpack.c.b16 %v803, %v799
    %v1024 = vpack.c.b16 %v804, %v800
    %v1025 = vpack.c.b16 %v809, %v805
    %v1026 = vpack.c.b16 %v810, %v806
    %v1027 = vpack.c.b16 %v811, %v807
    %v1028 = vpack.c.b16 %v812, %v808
    %v1029 = vpack.c.b16 %v817, %v813
    %v1030 = vpack.c.b16 %v818, %v814
    %v1031 = vpack.c.b16 %v819, %v815
    %v1032 = vpack.c.b16 %v820, %v816
    %v1033 = vpack.c.b16 %v825, %v821
    %v1034 = vpack.c.b16 %v826, %v822
    %v1035 = vpack.c.b16 %v827, %v823
    %v1036 = vpack.c.b16 %v828, %v824
    %v1037 = vpack.c.b16 %v833, %v829
    %v1038 = vpack.c.b16 %v834, %v830
    %v1039 = vpack.c.b16 %v835, %v831
    %v1040 = vpack.c.b16 %v836, %v832
    %v1041 = vpack.c.b16 %v841, %v837
    %v1042 = vpack.c.b16 %v842, %v838
    %v1043 = vpack.c.b16 %v843, %v839
    %v1044 = vpack.c.b16 %v844, %v840
    %v1045 = vpack.c.b16 %v849, %v845
    %v1046 = vpack.c.b16 %v850, %v846
    %v1047 = vpack.c.b16 %v851, %v847
    %v1048 = vpack.c.b16 %v852, %v848
    %vm1245 = vcmask 130048
    %v1247 = vsel %vm1245, %v68, 0
    %1249 = vmatprep.subr.bf16.mxu0 %v882
    %1250 = vmatpush1.bf16.msra.mxu0 %v881
    %1251 = vmatprep.subr.bf16.mxu0 %v878
    %1252 = vmatpush1.bf16.msra.mxu0 %v877
    %1253 = vmatprep.subr.bf16.mxu0 %v874
    %1254 = vmatpush1.bf16.msra.mxu0 %v873
    %1255 = vmatprep.subr.bf16.mxu0 %v870
    %1256 = vmatpush1.bf16.msra.mxu0 %v869
    %1257 = vmatprep.subr.bf16.mxu0 %v866
    %1258 = vmatpush1.bf16.msra.mxu0 %v865
    %1259 = vmatprep.subr.bf16.mxu0 %v862
    %1260 = vmatpush1.bf16.msra.mxu0 %v861
    %1261 = vmatprep.subr.bf16.mxu0 %v858
    %1262 = vmatpush1.bf16.msra.mxu0 %v857
    %1263 = vmatprep.subr.bf16.mxu0 %v854
    %1264 = vmatpush1.bf16.msra.mxu0 %v853
    %1265 = vmatprep.subr.bf16.mxu0 %v914
    %1266 = vmatpush2.bf16.msra.mxu0 %v913
    %1267 = vmatprep.subr.bf16.mxu0 %v910
    %1268 = vmatpush2.bf16.msra.mxu0 %v909
    %1269 = vmatprep.subr.bf16.mxu0 %v906
    %1270 = vmatpush2.bf16.msra.mxu0 %v905
    %1271 = vmatprep.subr.bf16.mxu0 %v902
    %1272 = vmatpush2.bf16.msra.mxu0 %v901
    %1273 = vmatprep.subr.bf16.mxu0 %v898
    %1274 = vmatpush2.bf16.msra.mxu0 %v897
    %1275 = vmatprep.subr.bf16.mxu0 %v894
    %1276 = vmatpush2.bf16.msra.mxu0 %v893
    %1277 = vmatprep.subr.bf16.mxu0 %v890
    %1278 = vmatpush2.bf16.msra.mxu0 %v889
    %1279 = vmatprep.subr.bf16.mxu0 %v886
    %1280 = vmatpush2.bf16.msra.mxu0 %v885
    %1281 = vmatprep.mubr.bf16.mxu0 %v63
    %1282 = vmatmul.mubr.bf16.gmra.mxu0 %v62
    %v1283 = vpop.f32.mrf.mxu0
    %v1284 = vadd.f32 0.0, %v1283
    %v1285 = vpop.f32.mrf.mxu0
    %v1286 = vadd.f32 0.0, %v1285
    %v1287 = vpop.f32.mrf.mxu0
    %v1288 = vpop.f32.mrf.mxu0
    %1289 = vdwg.mxu0
    %1290 = vmatprep.subr.bf16.mxu0 %v946
    %1291 = vmatpush1.bf16.msra.mxu0 %v945
    %1292 = vmatprep.subr.bf16.mxu0 %v942
    %1293 = vmatpush1.bf16.msra.mxu0 %v941
    %1294 = vmatprep.subr.bf16.mxu0 %v938
    %1295 = vmatpush1.bf16.msra.mxu0 %v937
    %1296 = vmatprep.subr.bf16.mxu0 %v934
    %1297 = vmatpush1.bf16.msra.mxu0 %v933
    %1298 = vmatprep.subr.bf16.mxu0 %v930
    %1299 = vmatpush1.bf16.msra.mxu0 %v929
    %1300 = vmatprep.subr.bf16.mxu0 %v926
    %1301 = vmatpush1.bf16.msra.mxu0 %v925
    %1302 = vmatprep.subr.bf16.mxu0 %v922
    %1303 = vmatpush1.bf16.msra.mxu0 %v921
    %1304 = vmatprep.subr.bf16.mxu0 %v918
    %1305 = vmatpush1.bf16.msra.mxu0 %v917
    %1306 = vmatprep.subr.bf16.mxu0 %v978
    %1307 = vmatpush2.bf16.msra.mxu0 %v977
    %1308 = vmatprep.subr.bf16.mxu0 %v974
    %1309 = vmatpush2.bf16.msra.mxu0 %v973
    %1310 = vmatprep.subr.bf16.mxu0 %v970
    %1311 = vmatpush2.bf16.msra.mxu0 %v969
    %1312 = vmatprep.subr.bf16.mxu0 %v966
    %1313 = vmatpush2.bf16.msra.mxu0 %v965
    %1314 = vmatprep.subr.bf16.mxu0 %v962
    %1315 = vmatpush2.bf16.msra.mxu0 %v961
    %1316 = vmatprep.subr.bf16.mxu0 %v958
    %1317 = vmatpush2.bf16.msra.mxu0 %v957
    %1318 = vmatprep.subr.bf16.mxu0 %v954
    %1319 = vmatpush2.bf16.msra.mxu0 %v953
    %1320 = vmatprep.subr.bf16.mxu0 %v950
    %1321 = vmatpush2.bf16.msra.mxu0 %v949
    %1322 = vmatprep.mubr.bf16.mxu0 %v65
    %1323 = vmatmul.mubr.bf16.gmra.mxu0 %v64
    %v1324 = vpop.f32.mrf.mxu0
    %v1325 = vadd.f32 %v1284, %v1324
    %v1326 = vpop.f32.mrf.mxu0
    %v1327 = vadd.f32 %v1286, %v1326
    %v1328 = vpop.f32.mrf.mxu0
    %v1329 = vpop.f32.mrf.mxu0
    %1330 = vdwg.mxu0
    %1331 = vmatprep.subr.bf16.mxu0 %v1010
    %1332 = vmatpush1.bf16.msra.mxu0 %v1009
    %1333 = vmatprep.subr.bf16.mxu0 %v1006
    %1334 = vmatpush1.bf16.msra.mxu0 %v1005
    %1335 = vmatprep.subr.bf16.mxu0 %v1002
    %1336 = vmatpush1.bf16.msra.mxu0 %v1001
    %1337 = vmatprep.subr.bf16.mxu0 %v998
    %1338 = vmatpush1.bf16.msra.mxu0 %v997
    %1339 = vmatprep.subr.bf16.mxu0 %v994
    %1340 = vmatpush1.bf16.msra.mxu0 %v993
    %1341 = vmatprep.subr.bf16.mxu0 %v990
    %1342 = vmatpush1.bf16.msra.mxu0 %v989
    %1343 = vmatprep.subr.bf16.mxu0 %v986
    %1344 = vmatpush1.bf16.msra.mxu0 %v985
    %1345 = vmatprep.subr.bf16.mxu0 %v982
    %1346 = vmatpush1.bf16.msra.mxu0 %v981
    %1347 = vmatprep.subr.bf16.mxu0 %v1042
    %1348 = vmatpush2.bf16.msra.mxu0 %v1041
    %1349 = vmatprep.subr.bf16.mxu0 %v1038
    %1350 = vmatpush2.bf16.msra.mxu0 %v1037
    %1351 = vmatprep.subr.bf16.mxu0 %v1034
    %1352 = vmatpush2.bf16.msra.mxu0 %v1033
    %1353 = vmatprep.subr.bf16.mxu0 %v1030
    %1354 = vmatpush2.bf16.msra.mxu0 %v1029
    %1355 = vmatprep.subr.bf16.mxu0 %v1026
    %1356 = vmatpush2.bf16.msra.mxu0 %v1025
    %1357 = vmatprep.subr.bf16.mxu0 %v1022
    %1358 = vmatpush2.bf16.msra.mxu0 %v1021
    %1359 = vmatprep.subr.bf16.mxu0 %v1018
    %1360 = vmatpush2.bf16.msra.mxu0 %v1017
    %1361 = vmatprep.subr.bf16.mxu0 %v1014
    %1362 = vmatpush2.bf16.msra.mxu0 %v1013
    %1363 = vmatprep.mubr.bf16.mxu0 %v67
    %1364 = vmatmul.mubr.bf16.gmra.mxu0 %v66
    %v1365 = vpop.f32.mrf.mxu0
    %v1366 = vadd.f32 %v1325, %v1365
    %v1367 = vpop.f32.mrf.mxu0
    %v1368 = vadd.f32 %v1327, %v1367
    %v1369 = vpop.f32.mrf.mxu0
    %v1370 = vpop.f32.mrf.mxu0
    %1371 = vdwg.mxu0
    %1372 = vmatprep.subr.bf16.mxu0 0
    %1373 = vmatpush1.bf16.msra.mxu0 0
    %1374 = vmatprep.subr.bf16.mxu0 0
    %1375 = vmatpush1.bf16.msra.mxu0 0
    %1376 = vmatprep.subr.bf16.mxu0 0
    %1377 = vmatpush1.bf16.msra.mxu0 0
    %1378 = vmatprep.subr.bf16.mxu0 0
    %1379 = vmatpush1.bf16.msra.mxu0 0
    %1380 = vmatprep.subr.bf16.mxu0 0
    %1381 = vmatpush1.bf16.msra.mxu0 0
    %1382 = vmatprep.subr.bf16.mxu0 0
    %1383 = vmatpush1.bf16.msra.mxu0 0
    %1384 = vmatprep.subr.bf16.mxu0 0
    %1385 = vmatpush1.bf16.msra.mxu0 0
    %1386 = vmatprep.subr.bf16.mxu0 %v1046
    %1387 = vmatpush1.bf16.msra.mxu0 %v1045
    %1388 = vmatprep.subr.bf16.mxu0 0
    %1389 = vmatpush2.bf16.msra.mxu0 0
    %1390 = vmatprep.subr.bf16.mxu0 0
    %1391 = vmatpush2.bf16.msra.mxu0 0
    %1392 = vmatprep.subr.bf16.mxu0 0
    %1393 = vmatpush2.bf16.msra.mxu0 0
    %1394 = vmatprep.subr.bf16.mxu0 0
    %1395 = vmatpush2.bf16.msra.mxu0 0
    %1396 = vmatprep.subr.bf16.mxu0 0
    %1397 = vmatpush2.bf16.msra.mxu0 0
    %1398 = vmatprep.subr.bf16.mxu0 0
    %1399 = vmatpush2.bf16.msra.mxu0 0
    %1400 = vmatprep.subr.bf16.mxu0 0
    %1401 = vmatpush2.bf16.msra.mxu0 0
    %1402 = vmatprep.subr.bf16.mxu0 0
    %1403 = vmatpush2.bf16.msra.mxu0 0
    %1404 = vmatprep.mubr.bf16.mxu0 0
    %1405 = vmatmul.mubr.bf16.gmra.mxu0 %v1247
    %v1406 = vpop.f32.mrf.mxu0
    %v1407 = vadd.f32 %v1366, %v1406
    %v1408 = vpop.f32.mrf.mxu0
    %v1409 = vadd.f32 %v1368, %v1408
    %v1410 = vpop.f32.mrf.mxu0
    %v1411 = vpop.f32.mrf.mxu0
    %1412 = vdwg.mxu0
    %1413 = vmatprep.subr.bf16.mxu0 %v884
    %1414 = vmatpush1.bf16.msra.mxu0 %v883
    %1415 = vmatprep.subr.bf16.mxu0 %v880
    %1416 = vmatpush1.bf16.msra.mxu0 %v879
    %1417 = vmatprep.subr.bf16.mxu0 %v876
    %1418 = vmatpush1.bf16.msra.mxu0 %v875
    %1419 = vmatprep.subr.bf16.mxu0 %v872
    %1420 = vmatpush1.bf16.msra.mxu0 %v871
    %1421 = vmatprep.subr.bf16.mxu0 %v868
    %1422 = vmatpush1.bf16.msra.mxu0 %v867
    %1423 = vmatprep.subr.bf16.mxu0 %v864
    %1424 = vmatpush1.bf16.msra.mxu0 %v863
    %1425 = vmatprep.subr.bf16.mxu0 %v860
    %1426 = vmatpush1.bf16.msra.mxu0 %v859
    %1427 = vmatprep.subr.bf16.mxu0 %v856
    %1428 = vmatpush1.bf16.msra.mxu0 %v855
    %1429 = vmatprep.subr.bf16.mxu0 %v916
    %1430 = vmatpush2.bf16.msra.mxu0 %v915
    %1431 = vmatprep.subr.bf16.mxu0 %v912
    %1432 = vmatpush2.bf16.msra.mxu0 %v911
    %1433 = vmatprep.subr.bf16.mxu0 %v908
    %1434 = vmatpush2.bf16.msra.mxu0 %v907
    %1435 = vmatprep.subr.bf16.mxu0 %v904
    %1436 = vmatpush2.bf16.msra.mxu0 %v903
    %1437 = vmatprep.subr.bf16.mxu0 %v900
    %1438 = vmatpush2.bf16.msra.mxu0 %v899
    %1439 = vmatprep.subr.bf16.mxu0 %v896
    %1440 = vmatpush2.bf16.msra.mxu0 %v895
    %1441 = vmatprep.subr.bf16.mxu0 %v892
    %1442 = vmatpush2.bf16.msra.mxu0 %v891
    %1443 = vmatprep.subr.bf16.mxu0 %v888
    %1444 = vmatpush2.bf16.msra.mxu0 %v887
    %1445 = vmatprep.mubr.bf16.mxu0 %v63
    %1446 = vmatmul.mubr.bf16.gmra.mxu0 %v62
    %v1447 = vpop.f32.mrf.mxu0
    %v1448 = vadd.f32 0.0, %v1447
    %v1449 = vpop.f32.mrf.mxu0
    %v1450 = vadd.f32 0.0, %v1449
    %v1451 = vpop.f32.mrf.mxu0
    %v1452 = vpop.f32.mrf.mxu0
    %1453 = vdwg.mxu0
    %1454 = vmatprep.subr.bf16.mxu0 %v948
    %1455 = vmatpush1.bf16.msra.mxu0 %v947
    %1456 = vmatprep.subr.bf16.mxu0 %v944
    %1457 = vmatpush1.bf16.msra.mxu0 %v943
    %1458 = vmatprep.subr.bf16.mxu0 %v940
    %1459 = vmatpush1.bf16.msra.mxu0 %v939
    %1460 = vmatprep.subr.bf16.mxu0 %v936
    %1461 = vmatpush1.bf16.msra.mxu0 %v935
    %1462 = vmatprep.subr.bf16.mxu0 %v932
    %1463 = vmatpush1.bf16.msra.mxu0 %v931
    %1464 = vmatprep.subr.bf16.mxu0 %v928
    %1465 = vmatpush1.bf16.msra.mxu0 %v927
    %1466 = vmatprep.subr.bf16.mxu0 %v924
    %1467 = vmatpush1.bf16.msra.mxu0 %v923
    %1468 = vmatprep.subr.bf16.mxu0 %v920
    %1469 = vmatpush1.bf16.msra.mxu0 %v919
    %1470 = vmatprep.subr.bf16.mxu0 %v980
    %1471 = vmatpush2.bf16.msra.mxu0 %v979
    %1472 = vmatprep.subr.bf16.mxu0 %v976
    %1473 = vmatpush2.bf16.msra.mxu0 %v975
    %1474 = vmatprep.subr.bf16.mxu0 %v972
    %1475 = vmatpush2.bf16.msra.mxu0 %v971
    %1476 = vmatprep.subr.bf16.mxu0 %v968
    %1477 = vmatpush2.bf16.msra.mxu0 %v967
    %1478 = vmatprep.subr.bf16.mxu0 %v964
    %1479 = vmatpush2.bf16.msra.mxu0 %v963
    %1480 = vmatprep.subr.bf16.mxu0 %v960
    %1481 = vmatpush2.bf16.msra.mxu0 %v959
    %1482 = vmatprep.subr.bf16.mxu0 %v956
    %1483 = vmatpush2.bf16.msra.mxu0 %v955
    %1484 = vmatprep.subr.bf16.mxu0 %v952
    %1485 = vmatpush2.bf16.msra.mxu0 %v951
    %1486 = vmatprep.mubr.bf16.mxu0 %v65
    %1487 = vmatmul.mubr.bf16.gmra.mxu0 %v64
    %v1488 = vpop.f32.mrf.mxu0
    %v1489 = vadd.f32 %v1448, %v1488
    %v1490 = vpop.f32.mrf.mxu0
    %v1491 = vadd.f32 %v1450, %v1490
    %v1492 = vpop.f32.mrf.mxu0
    %v1493 = vpop.f32.mrf.mxu0
    %1494 = vdwg.mxu0
    %1495 = vmatprep.subr.bf16.mxu0 %v1012
    %1496 = vmatpush1.bf16.msra.mxu0 %v1011
    %1497 = vmatprep.subr.bf16.mxu0 %v1008
    %1498 = vmatpush1.bf16.msra.mxu0 %v1007
    %1499 = vmatprep.subr.bf16.mxu0 %v1004
    %1500 = vmatpush1.bf16.msra.mxu0 %v1003
    %1501 = vmatprep.subr.bf16.mxu0 %v1000
    %1502 = vmatpush1.bf16.msra.mxu0 %v999
    %1503 = vmatprep.subr.bf16.mxu0 %v996
    %1504 = vmatpush1.bf16.msra.mxu0 %v995
    %1505 = vmatprep.subr.bf16.mxu0 %v992
    %1506 = vmatpush1.bf16.msra.mxu0 %v991
    %1507 = vmatprep.subr.bf16.mxu0 %v988
    %1508 = vmatpush1.bf16.msra.mxu0 %v987
    %1509 = vmatprep.subr.bf16.mxu0 %v984
    %1510 = vmatpush1.bf16.msra.mxu0 %v983
    %1511 = vmatprep.subr.bf16.mxu0 %v1044
    %1512 = vmatpush2.bf16.msra.mxu0 %v1043
    %1513 = vmatprep.subr.bf16.mxu0 %v1040
    %1514 = vmatpush2.bf16.msra.mxu0 %v1039
    %1515 = vmatprep.subr.bf16.mxu0 %v1036
    %1516 = vmatpush2.bf16.msra.mxu0 %v1035
    %1517 = vmatprep.subr.bf16.mxu0 %v1032
    %1518 = vmatpush2.bf16.msra.mxu0 %v1031
    %1519 = vmatprep.subr.bf16.mxu0 %v1028
    %1520 = vmatpush2.bf16.msra.mxu0 %v1027
    %1521 = vmatprep.subr.bf16.mxu0 %v1024
    %1522 = vmatpush2.bf16.msra.mxu0 %v1023
    %1523 = vmatprep.subr.bf16.mxu0 %v1020
    %1524 = vmatpush2.bf16.msra.mxu0 %v1019
    %1525 = vmatprep.subr.bf16.mxu0 %v1016
    %1526 = vmatpush2.bf16.msra.mxu0 %v1015
    %1527 = vmatprep.mubr.bf16.mxu0 %v67
    %1528 = vmatmul.mubr.bf16.gmra.mxu0 %v66
    %v1529 = vpop.f32.mrf.mxu0
    %v1530 = vadd.f32 %v1489, %v1529
    %v1531 = vpop.f32.mrf.mxu0
    %v1532 = vadd.f32 %v1491, %v1531
    %v1533 = vpop.f32.mrf.mxu0
    %v1534 = vpop.f32.mrf.mxu0
    %1535 = vdwg.mxu0
    %1536 = vmatprep.subr.bf16.mxu0 0
    %1537 = vmatpush1.bf16.msra.mxu0 0
    %1538 = vmatprep.subr.bf16.mxu0 0
    %1539 = vmatpush1.bf16.msra.mxu0 0
    %1540 = vmatprep.subr.bf16.mxu0 0
    %1541 = vmatpush1.bf16.msra.mxu0 0
    %1542 = vmatprep.subr.bf16.mxu0 0
    %1543 = vmatpush1.bf16.msra.mxu0 0
    %1544 = vmatprep.subr.bf16.mxu0 0
    %1545 = vmatpush1.bf16.msra.mxu0 0
    %1546 = vmatprep.subr.bf16.mxu0 0
    %1547 = vmatpush1.bf16.msra.mxu0 0
    %1548 = vmatprep.subr.bf16.mxu0 0
    %1549 = vmatpush1.bf16.msra.mxu0 0
    %1550 = vmatprep.subr.bf16.mxu0 %v1048
    %1551 = vmatpush1.bf16.msra.mxu0 %v1047
    %1552 = vmatprep.subr.bf16.mxu0 0
    %1553 = vmatpush2.bf16.msra.mxu0 0
    %1554 = vmatprep.subr.bf16.mxu0 0
    %1555 = vmatpush2.bf16.msra.mxu0 0
    %1556 = vmatprep.subr.bf16.mxu0 0
    %1557 = vmatpush2.bf16.msra.mxu0 0
    %1558 = vmatprep.subr.bf16.mxu0 0
    %1559 = vmatpush2.bf16.msra.mxu0 0
    %1560 = vmatprep.subr.bf16.mxu0 0
    %1561 = vmatpush2.bf16.msra.mxu0 0
    %1562 = vmatprep.subr.bf16.mxu0 0
    %1563 = vmatpush2.bf16.msra.mxu0 0
    %1564 = vmatprep.subr.bf16.mxu0 0
    %1565 = vmatpush2.bf16.msra.mxu0 0
    %1566 = vmatprep.subr.bf16.mxu0 0
    %1567 = vmatpush2.bf16.msra.mxu0 0
    %1568 = vmatprep.mubr.bf16.mxu0 0
    %1569 = vmatmul.mubr.bf16.gmra.mxu0 %v1247
    %v1570 = vpop.f32.mrf.mxu0
    %v1571 = vadd.f32 %v1530, %v1570
    %v1572 = vpop.f32.mrf.mxu0
    %v1573 = vadd.f32 %v1532, %v1572
    %v1574 = vpop.f32.mrf.mxu0
    %v1575 = vpop.f32.mrf.mxu0
    %1576 = vdwg.mxu0
    %v1577 = vmax.f32 %v1407, 0.0
    %v1578 = vmax.f32 %v1409, 0.0
    %v1579 = vmax.f32 %v1571, 0.0
    %v1580 = vmax.f32 %v1573, 0.0
    %v1581 = vpack.c.bf16 %v1577, %v1577
    %v1582 = vpack.c.bf16 %v1578, %v1578
    %v1583 = vpack.c.bf16 %v1579, %v1579
    %v1584 = vpack.c.bf16 %v1580, %v1580
    %v1585 = vld [vmem:[#allocation7] sm:$0xf]
    %v1586 = vld [vmem:[#allocation7 + $0x4] sm:$0xf]
    %v1587 = vld [vmem:[#allocation7 + $0x8] sm:$0xf]
    %v1588 = vld [vmem:[#allocation7 + $0xc] sm:$0xf]
    %v1589 = vld [vmem:[#allocation7 + $0x10] sm:$0xf]
    %v1590 = vld [vmem:[#allocation7 + $0x14] sm:$0xf]
    %v1591 = vld [vmem:[#allocation7 + $0x18] sm:$0xf]
    %v1592 = vld [vmem:[#allocation7 + $0x1c] sm:$0xf]
    %v1593 = vld [vmem:[#allocation7 + $0x20] sm:$0xf]
    %v1594 = vld [vmem:[#allocation7 + $0x24] sm:$0xf]
    %v1595 = vld [vmem:[#allocation7 + $0x28] sm:$0xf]
    %v1596 = vld [vmem:[#allocation7 + $0x2c] sm:$0xf]
    %v1597 = vld [vmem:[#allocation7 + $0x30] sm:$0xf]
    %v1598 = vld [vmem:[#allocation7 + $0x34] sm:$0xf]
    %v1599 = vld [vmem:[#allocation7 + $0x38] sm:$0xf]
    %v1600 = vld [vmem:[#allocation7 + $0x3c] sm:$0xf]
    %v1601 = vld [vmem:[#allocation7 + $0x40] sm:$0xf]
    %v1602 = vld [vmem:[#allocation7 + $0x44] sm:$0xf]
    %v1603 = vld [vmem:[#allocation7 + $0x48] sm:$0xf]
    %v1604 = vld [vmem:[#allocation7 + $0x4c] sm:$0xf]
    %v1605 = vld [vmem:[#allocation7 + $0x50] sm:$0xf]
    %v1606 = vld [vmem:[#allocation7 + $0x54] sm:$0xf]
    %v1607 = vld [vmem:[#allocation7 + $0x58] sm:$0xf]
    %v1608 = vld [vmem:[#allocation7 + $0x5c] sm:$0xf]
    %v1609 = vld [vmem:[#allocation7 + $0x60] sm:$0xf]
    %v1610 = vld [vmem:[#allocation7 + $0x64] sm:$0xf]
    %v1611 = vld [vmem:[#allocation7 + $0x68] sm:$0xf]
    %v1612 = vld [vmem:[#allocation7 + $0x6c] sm:$0xf]
    %v1613 = vld [vmem:[#allocation7 + $0x70] sm:$0xf]
    %v1614 = vld [vmem:[#allocation7 + $0x74] sm:$0xf]
    %v1615 = vld [vmem:[#allocation7 + $0x78] sm:$0xf]
    %v1616 = vld [vmem:[#allocation7 + $0x7c] sm:$0xf]
    %v1617 = vld [vmem:[#allocation7 + $0x80] sm:$0xf]
    %v1618 = vld [vmem:[#allocation7 + $0x84] sm:$0xf]
    %v1619 = vld [vmem:[#allocation7 + $0x88] sm:$0xf]
    %v1620 = vld [vmem:[#allocation7 + $0x8c] sm:$0xf]
    %v1621 = vld [vmem:[#allocation7 + $0x90] sm:$0xf]
    %v1622 = vld [vmem:[#allocation7 + $0x94] sm:$0xf]
    %v1623 = vld [vmem:[#allocation7 + $0x98] sm:$0xf]
    %v1624 = vld [vmem:[#allocation7 + $0x9c] sm:$0xf]
    %v1625 = vld [vmem:[#allocation7 + $0xa0] sm:$0xf]
    %v1626 = vld [vmem:[#allocation7 + $0xa4] sm:$0xf]
    %v1627 = vld [vmem:[#allocation7 + $0xa8] sm:$0xf]
    %v1628 = vld [vmem:[#allocation7 + $0xac] sm:$0xf]
    %v1629 = vld [vmem:[#allocation7 + $0xb0] sm:$0xf]
    %v1630 = vld [vmem:[#allocation7 + $0xb4] sm:$0xf]
    %v1631 = vld [vmem:[#allocation7 + $0xb8] sm:$0xf]
    %v1632 = vld [vmem:[#allocation7 + $0xbc] sm:$0xf]
    %v1633 = vld [vmem:[#allocation7 + $0xc0] sm:$0xf]
    %v1634 = vld [vmem:[#allocation7 + $0xc4] sm:$0xf]
    %v1635 = vld [vmem:[#allocation7 + $0xc8] sm:$0xf]
    %v1636 = vld [vmem:[#allocation7 + $0xcc] sm:$0xf]
    %v1637 = vld [vmem:[#allocation7 + $0xd0] sm:$0xf]
    %v1638 = vld [vmem:[#allocation7 + $0xd4] sm:$0xf]
    %v1639 = vld [vmem:[#allocation7 + $0xd8] sm:$0xf]
    %v1640 = vld [vmem:[#allocation7 + $0xdc] sm:$0xf]
    %v1641 = vld [vmem:[#allocation7 + $0xe0] sm:$0xf]
    %v1642 = vld [vmem:[#allocation7 + $0xe4] sm:$0xf]
    %v1643 = vld [vmem:[#allocation7 + $0xe8] sm:$0xf]
    %v1644 = vld [vmem:[#allocation7 + $0xec] sm:$0xf]
    %v1645 = vld [vmem:[#allocation7 + $0xf0] sm:$0xf]
    %v1646 = vld [vmem:[#allocation7 + $0xf4] sm:$0xf]
    %v1647 = vld [vmem:[#allocation7 + $0xf8] sm:$0xf]
    %v1648 = vld [vmem:[#allocation7 + $0xfc] sm:$0xf]
    %v1713 = vunpack.c.l.b16 %v1585
    %v1714 = vunpack.c.l.b16 %v1586
    %v1715 = vunpack.c.l.b16 %v1587
    %v1716 = vunpack.c.l.b16 %v1588
    %v1717 = vunpack.c.l.b16 %v1589
    %v1718 = vunpack.c.l.b16 %v1590
    %v1719 = vunpack.c.l.b16 %v1591
    %v1720 = vunpack.c.l.b16 %v1592
    %v1721 = vunpack.c.l.b16 %v1593
    %v1722 = vunpack.c.l.b16 %v1594
    %v1723 = vunpack.c.l.b16 %v1595
    %v1724 = vunpack.c.l.b16 %v1596
    %v1725 = vunpack.c.l.b16 %v1597
    %v1726 = vunpack.c.l.b16 %v1598
    %v1727 = vunpack.c.l.b16 %v1599
    %v1728 = vunpack.c.l.b16 %v1600
    %v1729 = vunpack.c.l.b16 %v1601
    %v1730 = vunpack.c.l.b16 %v1602
    %v1731 = vunpack.c.l.b16 %v1603
    %v1732 = vunpack.c.l.b16 %v1604
    %v1733 = vunpack.c.l.b16 %v1605
    %v1734 = vunpack.c.l.b16 %v1606
    %v1735 = vunpack.c.l.b16 %v1607
    %v1736 = vunpack.c.l.b16 %v1608
    %v1737 = vunpack.c.l.b16 %v1609
    %v1738 = vunpack.c.l.b16 %v1610
    %v1739 = vunpack.c.l.b16 %v1611
    %v1740 = vunpack.c.l.b16 %v1612
    %v1741 = vunpack.c.l.b16 %v1613
    %v1742 = vunpack.c.l.b16 %v1614
    %v1743 = vunpack.c.l.b16 %v1615
    %v1744 = vunpack.c.l.b16 %v1616
    %v1745 = vunpack.c.l.b16 %v1617
    %v1746 = vunpack.c.l.b16 %v1618
    %v1747 = vunpack.c.l.b16 %v1619
    %v1748 = vunpack.c.l.b16 %v1620
    %v1749 = vunpack.c.l.b16 %v1621
    %v1750 = vunpack.c.l.b16 %v1622
    %v1751 = vunpack.c.l.b16 %v1623
    %v1752 = vunpack.c.l.b16 %v1624
    %v1753 = vunpack.c.l.b16 %v1625
    %v1754 = vunpack.c.l.b16 %v1626
    %v1755 = vunpack.c.l.b16 %v1627
    %v1756 = vunpack.c.l.b16 %v1628
    %v1757 = vunpack.c.l.b16 %v1629
    %v1758 = vunpack.c.l.b16 %v1630
    %v1759 = vunpack.c.l.b16 %v1631
    %v1760 = vunpack.c.l.b16 %v1632
    %v1761 = vunpack.c.l.b16 %v1633
    %v1762 = vunpack.c.l.b16 %v1634
    %v1763 = vunpack.c.l.b16 %v1635
    %v1764 = vunpack.c.l.b16 %v1636
    %v1765 = vunpack.c.l.b16 %v1637
    %v1766 = vunpack.c.l.b16 %v1638
    %v1767 = vunpack.c.l.b16 %v1639
    %v1768 = vunpack.c.l.b16 %v1640
    %v1769 = vunpack.c.l.b16 %v1641
    %v1770 = vunpack.c.l.b16 %v1642
    %v1771 = vunpack.c.l.b16 %v1643
    %v1772 = vunpack.c.l.b16 %v1644
    %v1773 = vunpack.c.l.b16 %v1645
    %v1774 = vunpack.c.l.b16 %v1646
    %v1775 = vunpack.c.l.b16 %v1647
    %v1776 = vunpack.c.l.b16 %v1648
    %v1777 = vpack.c.b16 %v1714, %v1713
    %v1778 = vpack.c.b16 %v1716, %v1715
    %v1779 = vpack.c.b16 %v1718, %v1717
    %v1780 = vpack.c.b16 %v1720, %v1719
    %v1781 = vpack.c.b16 %v1722, %v1721
    %v1782 = vpack.c.b16 %v1724, %v1723
    %v1783 = vpack.c.b16 %v1726, %v1725
    %v1784 = vpack.c.b16 %v1728, %v1727
    %v1785 = vpack.c.b16 %v1730, %v1729
    %v1786 = vpack.c.b16 %v1732, %v1731
    %v1787 = vpack.c.b16 %v1734, %v1733
    %v1788 = vpack.c.b16 %v1736, %v1735
    %v1789 = vpack.c.b16 %v1738, %v1737
    %v1790 = vpack.c.b16 %v1740, %v1739
    %v1791 = vpack.c.b16 %v1742, %v1741
    %v1792 = vpack.c.b16 %v1744, %v1743
    %v1793 = vpack.c.b16 %v1746, %v1745
    %v1794 = vpack.c.b16 %v1748, %v1747
    %v1795 = vpack.c.b16 %v1750, %v1749
    %v1796 = vpack.c.b16 %v1752, %v1751
    %v1797 = vpack.c.b16 %v1754, %v1753
    %v1798 = vpack.c.b16 %v1756, %v1755
    %v1799 = vpack.c.b16 %v1758, %v1757
    %v1800 = vpack.c.b16 %v1760, %v1759
    %v1801 = vpack.c.b16 %v1762, %v1761
    %v1802 = vpack.c.b16 %v1764, %v1763
    %v1803 = vpack.c.b16 %v1766, %v1765
    %v1804 = vpack.c.b16 %v1768, %v1767
    %v1805 = vpack.c.b16 %v1770, %v1769
    %v1806 = vpack.c.b16 %v1772, %v1771
    %v1807 = vpack.c.b16 %v1774, %v1773
    %v1808 = vpack.c.b16 %v1776, %v1775
    %1841 = vmatprep.subr.bf16.mxu0 0
    %1842 = vmatpush1.bf16.msra.mxu0 %v1784
    %1843 = vmatprep.subr.bf16.mxu0 0
    %1844 = vmatpush1.bf16.msra.mxu0 %v1783
    %1845 = vmatprep.subr.bf16.mxu0 0
    %1846 = vmatpush1.bf16.msra.mxu0 %v1782
    %1847 = vmatprep.subr.bf16.mxu0 0
    %1848 = vmatpush1.bf16.msra.mxu0 %v1781
    %1849 = vmatprep.subr.bf16.mxu0 0
    %1850 = vmatpush1.bf16.msra.mxu0 %v1780
    %1851 = vmatprep.subr.bf16.mxu0 0
    %1852 = vmatpush1.bf16.msra.mxu0 %v1779
    %1853 = vmatprep.subr.bf16.mxu0 0
    %1854 = vmatpush1.bf16.msra.mxu0 %v1778
    %1855 = vmatprep.subr.bf16.mxu0 0
    %1856 = vmatpush1.bf16.msra.mxu0 %v1777
    %1857 = vmatprep.subr.bf16.mxu0 0
    %1858 = vmatpush2.bf16.msra.mxu0 %v1792
    %1859 = vmatprep.subr.bf16.mxu0 0
    %1860 = vmatpush2.bf16.msra.mxu0 %v1791
    %1861 = vmatprep.subr.bf16.mxu0 0
    %1862 = vmatpush2.bf16.msra.mxu0 %v1790
    %1863 = vmatprep.subr.bf16.mxu0 0
    %1864 = vmatpush2.bf16.msra.mxu0 %v1789
    %1865 = vmatprep.subr.bf16.mxu0 0
    %1866 = vmatpush2.bf16.msra.mxu0 %v1788
    %1867 = vmatprep.subr.bf16.mxu0 0
    %1868 = vmatpush2.bf16.msra.mxu0 %v1787
    %1869 = vmatprep.subr.bf16.mxu0 0
    %1870 = vmatpush2.bf16.msra.mxu0 %v1786
    %1871 = vmatprep.subr.bf16.mxu0 0
    %1872 = vmatpush2.bf16.msra.mxu0 %v1785
    %1873 = vmatprep.mubr.bf16.mxu0 %v1582
    %1874 = vmatmul.mubr.bf16.gmra.mxu0 %v1581
    %v1875 = vpop.f32.mrf.mxu0
    %v1876 = vadd.f32 0.0, %v1875
    %v1877 = vpop.f32.mrf.mxu0
    %v1878 = vpop.f32.mrf.mxu0
    %v1879 = vpop.f32.mrf.mxu0
    %1880 = vdwg.mxu0
    %1881 = vmatprep.subr.bf16.mxu0 0
    %1882 = vmatpush1.bf16.msra.mxu0 %v1800
    %1883 = vmatprep.subr.bf16.mxu0 0
    %1884 = vmatpush1.bf16.msra.mxu0 %v1799
    %1885 = vmatprep.subr.bf16.mxu0 0
    %1886 = vmatpush1.bf16.msra.mxu0 %v1798
    %1887 = vmatprep.subr.bf16.mxu0 0
    %1888 = vmatpush1.bf16.msra.mxu0 %v1797
    %1889 = vmatprep.subr.bf16.mxu0 0
    %1890 = vmatpush1.bf16.msra.mxu0 %v1796
    %1891 = vmatprep.subr.bf16.mxu0 0
    %1892 = vmatpush1.bf16.msra.mxu0 %v1795
    %1893 = vmatprep.subr.bf16.mxu0 0
    %1894 = vmatpush1.bf16.msra.mxu0 %v1794
    %1895 = vmatprep.subr.bf16.mxu0 0
    %1896 = vmatpush1.bf16.msra.mxu0 %v1793
    %1897 = vmatprep.subr.bf16.mxu0 0
    %1898 = vmatpush2.bf16.msra.mxu0 %v1808
    %1899 = vmatprep.subr.bf16.mxu0 0
    %1900 = vmatpush2.bf16.msra.mxu0 %v1807
    %1901 = vmatprep.subr.bf16.mxu0 0
    %1902 = vmatpush2.bf16.msra.mxu0 %v1806
    %1903 = vmatprep.subr.bf16.mxu0 0
    %1904 = vmatpush2.bf16.msra.mxu0 %v1805
    %1905 = vmatprep.subr.bf16.mxu0 0
    %1906 = vmatpush2.bf16.msra.mxu0 %v1804
    %1907 = vmatprep.subr.bf16.mxu0 0
    %1908 = vmatpush2.bf16.msra.mxu0 %v1803
    %1909 = vmatprep.subr.bf16.mxu0 0
    %1910 = vmatpush2.bf16.msra.mxu0 %v1802
    %1911 = vmatprep.subr.bf16.mxu0 0
    %1912 = vmatpush2.bf16.msra.mxu0 %v1801
    %1913 = vmatprep.mubr.bf16.mxu0 %v1584
    %1914 = vmatmul.mubr.bf16.gmra.mxu0 %v1583
    %v1915 = vpop.f32.mrf.mxu0
    %v1916 = vadd.f32 %v1876, %v1915
    %v1917 = vpop.f32.mrf.mxu0
    %v1918 = vpop.f32.mrf.mxu0
    %v1919 = vpop.f32.mrf.mxu0
    %1920 = vdwg.mxu0
    %1921 = vst [vmem:[#allocation8] sm:$0xff] %v1916
    // Predicated region
    $region26: #{mlp_three.1} parent=1 // pred_check
      _
    $region27: #{mlp_three.1} parent=1 // pred_check_branch
      %1923 = sbr.rel (0) target = $region29
    $region28: #{mlp_three.1} parent=1 // pred_region
      %s1925 = ssub.s32 128, 128
      %1926 = vsyncadd [#allocation4], %s1925
      %s1928 = sshll.u32 [#allocation8], 4
      %s1929 = int_to_ptr.vmem [resolvable:$true] %s1928
      %1931 = dma.vmem_to_hbm [thread:$0]  %s1929, 128, %s3, [#allocation4]
    $region29: #{mlp_three.1} parent=1 // pred_fallthru
      _
    // Predicated region
    $region30: #{mlp_three.1} parent=1 // pred_check
      _
    $region31: #{mlp_three.1} parent=1 // pred_check_branch
      %1933 = sbr.rel (0) target = $region33
    $region32: #{mlp_three.1} parent=1 // pred_region
      %1934 = dma.done [#allocation4], 128
    $region33: #{mlp_three.1} parent=1 // pred_fallthru
      _
    %1935 = vsyncpa [#allocation3], 1
    %1936 = vsyncpa [#allocation6], 1
    %1937 = vsyncpa [#allocation4], 1

</llo_original>
